<compile_context>
chip_gen: v7x
topology: tpu7x:2x2x1
jax: 0.10.0
libtpu: 0.0.40
codegen_flags: <defaults>
</compile_context>

<pallas_src>
import functools

import jax
import jax.numpy as jnp
from jax import lax
from jax.experimental import pallas as pl
from jax.experimental.pallas import tpu as pltpu

_EPS = 1e-5
_VMEM_LIMIT = 32 * 1024 * 1024
_MAX_TILE_B = 512  # multiple of 256 (v6e/v7x MXU height); fits easily in VMEM


def _round_up(n, m):
    return (n + m - 1) // m * m


def _choose_tile(b):
    """Pick a batch tile that satisfies the (8, 128) block rules."""
    if b > _MAX_TILE_B:
        return _MAX_TILE_B, _round_up(b, _MAX_TILE_B)
    b_pad = _round_up(b, 8)
    return b_pad, b_pad  # single tile == full (padded) array


# ---------------------------------------------------------------------------
# Kernels
# ---------------------------------------------------------------------------

def _make_stats_kernel(n_layers):
    """Kernel: recompute activations up to depth `n_layers` from x (using the
    already-BN-folded weights) and accumulate full-batch sum / sum-of-squares
    of that activation into two resident (1, F) outputs."""

    def kernel(n_ref, x_ref, *rest):
        sum_ref, sq_ref = rest[-2], rest[-1]
        layer = rest[:-2]
        i = pl.program_id(0)

        @pl.when(i == 0)
        def _init():
            sum_ref[...] = jnp.zeros_like(sum_ref)
            sq_ref[...] = jnp.zeros_like(sq_ref)

        h = x_ref[...].astype(jnp.float32)
        for l in range(n_layers):
            w = layer[2 * l][...]
            b = layer[2 * l + 1][...]
            h = jnp.maximum(
                jnp.dot(h, w, preferred_element_type=jnp.float32) + b, 0.0)

        # Mask batch-padding rows so statistics cover exactly the real batch.
        tile_b = h.shape[0]
        row = i * tile_b + lax.broadcasted_iota(jnp.int32, (tile_b, 1), 0)
        h = jnp.where(row < n_ref[0], h, 0.0)

        # sum / sum-of-squares via a ones-row matmul (MXU, not XLU).
        ones = jnp.ones((1, tile_b), jnp.float32)
        sum_ref[...] += jnp.dot(ones, h, preferred_element_type=jnp.float32)
        sq_ref[...] += jnp.dot(ones, h * h, preferred_element_type=jnp.float32)

    return kernel


def _forward_kernel(x_ref, w1_ref, b1_ref, w2_ref, b2_ref, w3_ref, b3_ref,
                    w4t_ref, b4_ref, o_ref):
    """Fused forward with BN already folded into the Linear weights."""
    h = x_ref[...].astype(jnp.float32)
    h = jnp.maximum(
        jnp.dot(h, w1_ref[...], preferred_element_type=jnp.float32)
        + b1_ref[...], 0.0)
    h = jnp.maximum(
        jnp.dot(h, w2_ref[...], preferred_element_type=jnp.float32)
        + b2_ref[...], 0.0)
    h = jnp.maximum(
        jnp.dot(h, w3_ref[...], preferred_element_type=jnp.float32)
        + b3_ref[...], 0.0)
    # fc4 as (1, 3) x (TILE_B, 3)^T -> (1, TILE_B): lane-dense output store.
    o_ref[...] = lax.dot_general(
        w4t_ref[...], h, (((1,), (1,)), ((), ())),
        preferred_element_type=jnp.float32) + b4_ref[...]


# ---------------------------------------------------------------------------
# pallas_call wrappers
# ---------------------------------------------------------------------------

def _batch_stats(x_pad, n_arr, layer_params, feat_out, tile_b, n_tiles):
    """Full-batch sum and sum-of-squares of the depth-len(layer_params)//2
    activation (depth 0 == x itself)."""
    n_layers = len(layer_params) // 2
    kernel = _make_stats_kernel(n_layers)

    in_specs = [pl.BlockSpec((tile_b, x_pad.shape[1]), lambda i, n: (i, 0))]
    in_specs += [pl.BlockSpec(p.shape, lambda i, n: (0, 0))
                 for p in layer_params]
    stat_spec = pl.BlockSpec((1, feat_out), lambda i, n: (0, 0))

    return pl.pallas_call(
        kernel,
        out_shape=(jax.ShapeDtypeStruct((1, feat_out), jnp.float32),
                   jax.ShapeDtypeStruct((1, feat_out), jnp.float32)),
        grid_spec=pltpu.PrefetchScalarGridSpec(
            num_scalar_prefetch=1,
            grid=(n_tiles,),
            in_specs=in_specs,
            out_specs=(stat_spec, stat_spec),
        ),
        compiler_params=pltpu.CompilerParams(
            dimension_semantics=("arbitrary",),  # resident accumulator output
            vmem_limit_bytes=_VMEM_LIMIT,
        ),
    )(n_arr, x_pad, *layer_params)


def _fused_forward(x_pad, folded, tile_b, n_tiles):
    b_pad, f = x_pad.shape
    in_specs = [pl.BlockSpec((tile_b, f), lambda i: (i, 0))]
    in_specs += [pl.BlockSpec(p.shape, lambda i: (0, 0)) for p in folded]
    out_spec = pl.BlockSpec((1, tile_b), lambda i: (0, i))

    return pl.pallas_call(
        _forward_kernel,
        out_shape=jax.ShapeDtypeStruct((1, b_pad), jnp.float32),
        grid=(n_tiles,),
        in_specs=in_specs,
        out_specs=out_spec,
        compiler_params=pltpu.CompilerParams(
            dimension_semantics=("parallel",),  # megacore-shardable batch axis
            vmem_limit_bytes=_VMEM_LIMIT,
        ),
    )(x_pad, *folded)


def _fold_bn_into_linear(s, ss, n, gamma, beta, w, b):
    """Fold BatchNorm (batch stats) into the following Linear ([in,out] W)."""
    mean = s / n
    var = jnp.maximum(ss / n - mean * mean, 0.0)       # biased batch variance
    scale = gamma * lax.rsqrt(var + _EPS)              # (1, in)
    w_f = w * scale.reshape(-1, 1)                     # scale rows of W
    b_f = b + (beta - mean * scale) @ w                # (1, out)
    return w_f, b_f


@jax.jit
def basenet_forward(x, params):
    """params: flat tuple (g1,be1,w1,b1, g2,be2,w2,b2, g3,be3,w3,b3, w4,b4);
    weights stored as [in, out], biases/gammas/betas as (1, dim)."""
    (g1, be1, w1, b1,
     g2, be2, w2, b2,
     g3, be3, w3, b3,
     w4, b4) = params

    B, F = x.shape
    tile_b, b_pad = _choose_tile(B)
    n_tiles = b_pad // tile_b

    x32 = x.astype(jnp.float32)
    x_pad = jnp.pad(x32, ((0, b_pad - B), (0, 0)))     # zero rows (masked in stats)
    n_arr = jnp.array([B], jnp.int32)

    # BN1 stats over x -> fold into fc1.
    s, ss = _batch_stats(x_pad, n_arr, (), F, tile_b, n_tiles)
    w1f, b1f = _fold_bn_into_linear(s, ss, B, g1, be1, w1, b1)

    # BN2 stats over h1 = relu(x @ w1f + b1f) -> fold into fc2.
    s, ss = _batch_stats(x_pad, n_arr, (w1f, b1f), 31, tile_b, n_tiles)
    w2f, b2f = _fold_bn_into_linear(s, ss, B, g2, be2, w2, b2)

    # BN3 stats over h2 -> fold into fc3.
    s, ss = _batch_stats(x_pad, n_arr, (w1f, b1f, w2f, b2f), 11, tile_b, n_tiles)
    w3f, b3f = _fold_bn_into_linear(s, ss, B, g3, be3, w3, b3)

    # Fused forward; fc4 weight passed pre-transposed as (1, 3) for the
    # lane-dense (1, B) output layout.
    folded = (w1f, b1f, w2f, b2f, w3f, b3f, w4.T, b4)
    out_row = _fused_forward(x_pad, folded, tile_b, n_tiles)
    return out_row[0, :B].reshape(B, 1)


# ---------------------------------------------------------------------------
# Parameters, pure-JAX reference, demo
# ---------------------------------------------------------------------------

def init_params(key, n_features):
    """PyTorch-like defaults: Linear uniform +-1/sqrt(fan_in) (stored [in,out]);
    BN gamma=1, beta=0."""
    def linear(k, fan_in, fan_out):
        kw, kb = jax.random.split(k)
        bound = 1.0 / jnp.sqrt(float(fan_in))
        w = jax.random.uniform(kw, (fan_in, fan_out), jnp.float32, -bound, bound)
        b = jax.random.uniform(kb, (1, fan_out), jnp.float32, -bound, bound)
        return w, b

    k1, k2, k3, k4 = jax.random.split(key, 4)
    w1, b1 = linear(k1, n_features, 31)
    w2, b2 = linear(k2, 31, 11)
    w3, b3 = linear(k3, 11, 3)
    w4, b4 = linear(k4, 3, 1)

    ones = lambda d: jnp.ones((1, d), jnp.float32)
    zeros = lambda d: jnp.zeros((1, d), jnp.float32)
    return (ones(n_features), zeros(n_features), w1, b1,
            ones(31), zeros(31), w2, b2,
            ones(11), zeros(11), w3, b3,
            w4, b4)


def _bn_train(h, gamma, beta):
    mean = jnp.mean(h, axis=0, keepdims=True)
    centered = h - mean
    var = jnp.mean(centered * centered, axis=0, keepdims=True)
    return centered * lax.rsqrt(var + _EPS) * gamma + beta


def basenet_reference(x, params):
    (g1, be1, w1, b1,
     g2, be2, w2, b2,
     g3, be3, w3, b3,
     w4, b4) = params
    h = _bn_train(x.astype(jnp.float32), g1, be1)
    h = jnp.maximum(h @ w1 + b1, 0.0)
    h = _bn_train(h, g2, be2)
    h = jnp.maximum(h @ w2 + b2, 0.0)
    h = _bn_train(h, g3, be3)
    h = jnp.maximum(h @ w3 + b3, 0.0)
    return h @ w4 + b4


if __name__ == "__main__":
    N_FEATURES = 32
    key = jax.random.PRNGKey(0)
    kp, kx1, kx2 = jax.random.split(key, 3)
    params = init_params(kp, N_FEATURES)

    # B=60: single padded tile + padded-row masking; B=1100: multi-tile grid.
    for B, kx in ((60, kx1), (1100, kx2)):
        x = jax.random.normal(kx, (B, N_FEATURES), jnp.float32)
        out = jax.block_until_ready(basenet_forward(x, params))
        ref = basenet_reference(x, params)
        assert out.shape == (B, 1), out.shape
        err = float(jnp.max(jnp.abs(out - ref)))
        assert jnp.allclose(out, ref, atol=1e-3, rtol=1e-3), (
            f"B={B} max abs err {err}")
    print("KERNEL_OK")
</pallas_src>

<mosaic_0001>
module attributes {stable_mosaic.version = 11 : i64} {
  func.func @kernel(%arg0: i32, %arg1: memref<1xi32, #tpu.memory_space<smem>>, %arg2: memref<64x32xf32, #tpu.memory_space<vmem>>, %arg3: memref<1x32xf32, #tpu.memory_space<vmem>>, %arg4: memref<1x32xf32, #tpu.memory_space<vmem>>) attributes {dimension_semantics = [#tpu.dimension_semantics<arbitrary>], iteration_bounds = array<i64: 1>, scalar_prefetch = 1 : i64, scratch_operands = 0 : i64, tpu.core_type = #tpu.core_type<tc>, window_params = [{transform_indices = @transform_0, window_bounds = array<i64: 64, 32>}, {pipeline_mode = #tpu.pipeline_mode<synchronous>, transform_indices = @transform_1, window_bounds = array<i64: 1, 32>}, {pipeline_mode = #tpu.pipeline_mode<synchronous>, transform_indices = @transform_2, window_bounds = array<i64: 1, 32>}]} {
    %c0_i32 = arith.constant 0 : i32
    %0 = arith.cmpi eq, %arg0, %c0_i32 : i32
    %1 = arith.extui %0 : i1 to i32
    %c0_i32_0 = arith.constant 0 : i32
    %2 = arith.cmpi ne, %1, %c0_i32_0 : i32
    scf.if %2 {
      %cst_14 = arith.constant 0.000000e+00 : f32
      %25 = vector.broadcast %cst_14 : f32 to vector<1x32xf32>
      %c0_15 = arith.constant 0 : index
      %c0_16 = arith.constant 0 : index
      %26 = vector.load %arg3[%c0_15, %c0_16] : memref<1x32xf32, #tpu.memory_space<vmem>>, vector<1x32xf32>
      tpu.vector_store %arg3[%c0_15, %c0_16], %25 {strides = array<i32>} : memref<1x32xf32, #tpu.memory_space<vmem>>, vector<1x32xf32>,
      %cst_17 = arith.constant 0.000000e+00 : f32
      %27 = vector.broadcast %cst_17 : f32 to vector<1x32xf32>
      %c0_18 = arith.constant 0 : index
      %c0_19 = arith.constant 0 : index
      %28 = vector.load %arg4[%c0_18, %c0_19] : memref<1x32xf32, #tpu.memory_space<vmem>>, vector<1x32xf32>
      tpu.vector_store %arg4[%c0_18, %c0_19], %27 {strides = array<i32>} : memref<1x32xf32, #tpu.memory_space<vmem>>, vector<1x32xf32>,
    } else {
    }
    %c0 = arith.constant 0 : index
    %c0_1 = arith.constant 0 : index
    %3 = vector.load %arg2[%c0, %c0_1] : memref<64x32xf32, #tpu.memory_space<vmem>>, vector<64x32xf32>
    %c64_i32 = arith.constant 64 : i32
    %4 = arith.muli %arg0, %c64_i32 : i32
    %5 = tpu.iota {dimensions = array<i32: 0>} : vector<64x1xi32>
    %6 = vector.broadcast %4 : i32 to vector<64x1xi32>
    %7 = arith.addi %6, %5 : vector<64x1xi32>
    %c0_2 = arith.constant 0 : index
    %8 = memref.load %arg1[%c0_2] : memref<1xi32, #tpu.memory_space<smem>>
    %9 = vector.broadcast %8 : i32 to vector<64x1xi32>
    %10 = arith.cmpi slt, %7, %9 : vector<64x1xi32>
    %cst = arith.constant 0.000000e+00 : f32
    %11 = vector.shape_cast %10 : vector<64x1xi1> to vector<64x1xi1>
    %12 = vector.broadcast %11 : vector<64x1xi1> to vector<64x32xi1>
    %13 = vector.broadcast %cst : f32 to vector<64x32xf32>
    %14 = arith.select %12, %3, %13 : vector<64x32xi1>, vector<64x32xf32>
    %cst_3 = arith.constant 1.000000e+00 : f32
    %15 = vector.broadcast %cst_3 : f32 to vector<1x64xf32>
    %c0_4 = arith.constant 0 : index
    %c0_5 = arith.constant 0 : index
    %16 = vector.load %arg3[%c0_4, %c0_5] : memref<1x32xf32, #tpu.memory_space<vmem>>, vector<1x32xf32>
    %cst_6 = arith.constant dense<0.000000e+00> : vector<1x32xf32>
    %17 = tpu.matmul %15, %14, %cst_6 {dimension_numbers = #tpu.dot_dimension_numbers<[1], [0], [0], [1], [0, 0, 1, 1], [], []>} : vector<1x64xf32>, vector<64x32xf32>, vector<1x32xf32> -> vector<1x32xf32>
    %18 = arith.addf %16, %17 : vector<1x32xf32>
    %c0_7 = arith.constant 0 : index
    %c0_8 = arith.constant 0 : index
    %19 = vector.load %arg3[%c0_7, %c0_8] : memref<1x32xf32, #tpu.memory_space<vmem>>, vector<1x32xf32>
    tpu.vector_store %arg3[%c0_7, %c0_8], %18 {strides = array<i32>} : memref<1x32xf32, #tpu.memory_space<vmem>>, vector<1x32xf32>,
    %c0_9 = arith.constant 0 : index
    %c0_10 = arith.constant 0 : index
    %20 = vector.load %arg4[%c0_9, %c0_10] : memref<1x32xf32, #tpu.memory_space<vmem>>, vector<1x32xf32>
    %21 = arith.mulf %14, %14 : vector<64x32xf32>
    %cst_11 = arith.constant dense<0.000000e+00> : vector<1x32xf32>
    %22 = tpu.matmul %15, %21, %cst_11 {dimension_numbers = #tpu.dot_dimension_numbers<[1], [0], [0], [1], [0, 0, 1, 1], [], []>} : vector<1x64xf32>, vector<64x32xf32>, vector<1x32xf32> -> vector<1x32xf32>
    %23 = arith.addf %20, %22 : vector<1x32xf32>
    %c0_12 = arith.constant 0 : index
    %c0_13 = arith.constant 0 : index
    %24 = vector.load %arg4[%c0_12, %c0_13] : memref<1x32xf32, #tpu.memory_space<vmem>>, vector<1x32xf32>
    tpu.vector_store %arg4[%c0_12, %c0_13], %23 {strides = array<i32>} : memref<1x32xf32, #tpu.memory_space<vmem>>, vector<1x32xf32>,
    return
  }
  func.func @transform_0(%arg0: i32, %arg1: memref<1xi32, #tpu.memory_space<smem>>) -> (i32, i32) {
    %c0_i32 = arith.constant 0 : i32
    %c0_i32_0 = arith.constant 0 : i32
    return %arg0, %c0_i32 : i32, i32
  }
  func.func @transform_1(%arg0: i32, %arg1: memref<1xi32, #tpu.memory_space<smem>>) -> (i32, i32) {
    %c0_i32 = arith.constant 0 : i32
    %c0_i32_0 = arith.constant 0 : i32
    %c0_i32_1 = arith.constant 0 : i32
    return %c0_i32, %c0_i32_0 : i32, i32
  }
  func.func @transform_2(%arg0: i32, %arg1: memref<1xi32, #tpu.memory_space<smem>>) -> (i32, i32) {
    %c0_i32 = arith.constant 0 : i32
    %c0_i32_0 = arith.constant 0 : i32
    %c0_i32_1 = arith.constant 0 : i32
    return %c0_i32, %c0_i32_0 : i32, i32
  }
}

module attributes {stable_mosaic.version = 11 : i64} {
  func.func @kernel(%arg0: i32, %arg1: memref<1xi32, #tpu.memory_space<smem>>, %arg2: memref<64x32xf32, #tpu.memory_space<vmem>>, %arg3: memref<32x31xf32, #tpu.memory_space<vmem>>, %arg4: memref<1x31xf32, #tpu.memory_space<vmem>>, %arg5: memref<1x31xf32, #tpu.memory_space<vmem>>, %arg6: memref<1x31xf32, #tpu.memory_space<vmem>>) attributes {dimension_semantics = [#tpu.dimension_semantics<arbitrary>], iteration_bounds = array<i64: 1>, scalar_prefetch = 1 : i64, scratch_operands = 0 : i64, tpu.core_type = #tpu.core_type<tc>, window_params = [{transform_indices = @transform_0, window_bounds = array<i64: 64, 32>}, {pipeline_mode = #tpu.pipeline_mode<synchronous>, transform_indices = @transform_1, window_bounds = array<i64: 32, 31>}, {pipeline_mode = #tpu.pipeline_mode<synchronous>, transform_indices = @transform_2, window_bounds = array<i64: 1, 31>}, {pipeline_mode = #tpu.pipeline_mode<synchronous>, transform_indices = @transform_3, window_bounds = array<i64: 1, 31>}, {pipeline_mode = #tpu.pipeline_mode<synchronous>, transform_indices = @transform_4, window_bounds = array<i64: 1, 31>}]} {
    %c0_i32 = arith.constant 0 : i32
    %0 = arith.cmpi eq, %arg0, %c0_i32 : i32
    %1 = arith.extui %0 : i1 to i32
    %c0_i32_0 = arith.constant 0 : i32
    %2 = arith.cmpi ne, %1, %c0_i32_0 : i32
    scf.if %2 {
      %cst_20 = arith.constant 0.000000e+00 : f32
      %32 = vector.broadcast %cst_20 : f32 to vector<1x31xf32>
      %c0_21 = arith.constant 0 : index
      %c0_22 = arith.constant 0 : index
      %33 = vector.load %arg5[%c0_21, %c0_22] : memref<1x31xf32, #tpu.memory_space<vmem>>, vector<1x31xf32>
      tpu.vector_store %arg5[%c0_21, %c0_22], %32 {strides = array<i32>} : memref<1x31xf32, #tpu.memory_space<vmem>>, vector<1x31xf32>,
      %cst_23 = arith.constant 0.000000e+00 : f32
      %34 = vector.broadcast %cst_23 : f32 to vector<1x31xf32>
      %c0_24 = arith.constant 0 : index
      %c0_25 = arith.constant 0 : index
      %35 = vector.load %arg6[%c0_24, %c0_25] : memref<1x31xf32, #tpu.memory_space<vmem>>, vector<1x31xf32>
      tpu.vector_store %arg6[%c0_24, %c0_25], %34 {strides = array<i32>} : memref<1x31xf32, #tpu.memory_space<vmem>>, vector<1x31xf32>,
    } else {
    }
    %c0 = arith.constant 0 : index
    %c0_1 = arith.constant 0 : index
    %3 = vector.load %arg2[%c0, %c0_1] : memref<64x32xf32, #tpu.memory_space<vmem>>, vector<64x32xf32>
    %c0_2 = arith.constant 0 : index
    %c0_3 = arith.constant 0 : index
    %4 = vector.load %arg3[%c0_2, %c0_3] : memref<32x31xf32, #tpu.memory_space<vmem>>, vector<32x31xf32>
    %c0_4 = arith.constant 0 : index
    %c0_5 = arith.constant 0 : index
    %5 = vector.load %arg4[%c0_4, %c0_5] : memref<1x31xf32, #tpu.memory_space<vmem>>, vector<1x31xf32>
    %cst = arith.constant dense<0.000000e+00> : vector<64x31xf32>
    %6 = tpu.matmul %3, %4, %cst {dimension_numbers = #tpu.dot_dimension_numbers<[1], [0], [0], [1], [0, 0, 1, 1], [], []>} : vector<64x32xf32>, vector<32x31xf32>, vector<64x31xf32> -> vector<64x31xf32>
    %7 = vector.broadcast %5 : vector<1x31xf32> to vector<64x31xf32>
    %8 = arith.addf %6, %7 : vector<64x31xf32>
    %cst_6 = arith.constant 0.000000e+00 : f32
    %9 = vector.broadcast %cst_6 : f32 to vector<64x31xf32>
    %10 = arith.maximumf %8, %9 : vector<64x31xf32>
    %c64_i32 = arith.constant 64 : i32
    %11 = arith.muli %arg0, %c64_i32 : i32
    %12 = tpu.iota {dimensions = array<i32: 0>} : vector<64x1xi32>
    %13 = vector.broadcast %11 : i32 to vector<64x1xi32>
    %14 = arith.addi %13, %12 : vector<64x1xi32>
    %c0_7 = arith.constant 0 : index
    %15 = memref.load %arg1[%c0_7] : memref<1xi32, #tpu.memory_space<smem>>
    %16 = vector.broadcast %15 : i32 to vector<64x1xi32>
    %17 = arith.cmpi slt, %14, %16 : vector<64x1xi32>
    %cst_8 = arith.constant 0.000000e+00 : f32
    %18 = vector.shape_cast %17 : vector<64x1xi1> to vector<64x1xi1>
    %19 = vector.broadcast %18 : vector<64x1xi1> to vector<64x31xi1>
    %20 = vector.broadcast %cst_8 : f32 to vector<64x31xf32>
    %21 = arith.select %19, %10, %20 : vector<64x31xi1>, vector<64x31xf32>
    %cst_9 = arith.constant 1.000000e+00 : f32
    %22 = vector.broadcast %cst_9 : f32 to vector<1x64xf32>
    %c0_10 = arith.constant 0 : index
    %c0_11 = arith.constant 0 : index
    %23 = vector.load %arg5[%c0_10, %c0_11] : memref<1x31xf32, #tpu.memory_space<vmem>>, vector<1x31xf32>
    %cst_12 = arith.constant dense<0.000000e+00> : vector<1x31xf32>
    %24 = tpu.matmul %22, %21, %cst_12 {dimension_numbers = #tpu.dot_dimension_numbers<[1], [0], [0], [1], [0, 0, 1, 1], [], []>} : vector<1x64xf32>, vector<64x31xf32>, vector<1x31xf32> -> vector<1x31xf32>
    %25 = arith.addf %23, %24 : vector<1x31xf32>
    %c0_13 = arith.constant 0 : index
    %c0_14 = arith.constant 0 : index
    %26 = vector.load %arg5[%c0_13, %c0_14] : memref<1x31xf32, #tpu.memory_space<vmem>>, vector<1x31xf32>
    tpu.vector_store %arg5[%c0_13, %c0_14], %25 {strides = array<i32>} : memref<1x31xf32, #tpu.memory_space<vmem>>, vector<1x31xf32>,
    %c0_15 = arith.constant 0 : index
    %c0_16 = arith.constant 0 : index
    %27 = vector.load %arg6[%c0_15, %c0_16] : memref<1x31xf32, #tpu.memory_space<vmem>>, vector<1x31xf32>
    %28 = arith.mulf %21, %21 : vector<64x31xf32>
    %cst_17 = arith.constant dense<0.000000e+00> : vector<1x31xf32>
    %29 = tpu.matmul %22, %28, %cst_17 {dimension_numbers = #tpu.dot_dimension_numbers<[1], [0], [0], [1], [0, 0, 1, 1], [], []>} : vector<1x64xf32>, vector<64x31xf32>, vector<1x31xf32> -> vector<1x31xf32>
    %30 = arith.addf %27, %29 : vector<1x31xf32>
    %c0_18 = arith.constant 0 : index
    %c0_19 = arith.constant 0 : index
    %31 = vector.load %arg6[%c0_18, %c0_19] : memref<1x31xf32, #tpu.memory_space<vmem>>, vector<1x31xf32>
    tpu.vector_store %arg6[%c0_18, %c0_19], %30 {strides = array<i32>} : memref<1x31xf32, #tpu.memory_space<vmem>>, vector<1x31xf32>,
    return
  }
  func.func @transform_0(%arg0: i32, %arg1: memref<1xi32, #tpu.memory_space<smem>>) -> (i32, i32) {
    %c0_i32 = arith.constant 0 : i32
    %c0_i32_0 = arith.constant 0 : i32
    return %arg0, %c0_i32 : i32, i32
  }
  func.func @transform_1(%arg0: i32, %arg1: memref<1xi32, #tpu.memory_space<smem>>) -> (i32, i32) {
    %c0_i32 = arith.constant 0 : i32
    %c0_i32_0 = arith.constant 0 : i32
    %c0_i32_1 = arith.constant 0 : i32
    return %c0_i32, %c0_i32_0 : i32, i32
  }
  func.func @transform_2(%arg0: i32, %arg1: memref<1xi32, #tpu.memory_space<smem>>) -> (i32, i32) {
    %c0_i32 = arith.constant 0 : i32
    %c0_i32_0 = arith.constant 0 : i32
    %c0_i32_1 = arith.constant 0 : i32
    return %c0_i32, %c0_i32_0 : i32, i32
  }
  func.func @transform_3(%arg0: i32, %arg1: memref<1xi32, #tpu.memory_space<smem>>) -> (i32, i32) {
    %c0_i32 = arith.constant 0 : i32
    %c0_i32_0 = arith.constant 0 : i32
    %c0_i32_1 = arith.constant 0 : i32
    return %c0_i32, %c0_i32_0 : i32, i32
  }
  func.func @transform_4(%arg0: i32, %arg1: memref<1xi32, #tpu.memory_space<smem>>) -> (i32, i32) {
    %c0_i32 = arith.constant 0 : i32
    %c0_i32_0 = arith.constant 0 : i32
    %c0_i32_1 = arith.constant 0 : i32
    return %c0_i32, %c0_i32_0 : i32, i32
  }
}

module attributes {stable_mosaic.version = 11 : i64} {
  func.func @kernel(%arg0: i32, %arg1: memref<1xi32, #tpu.memory_space<smem>>, %arg2: memref<64x32xf32, #tpu.memory_space<vmem>>, %arg3: memref<32x31xf32, #tpu.memory_space<vmem>>, %arg4: memref<1x31xf32, #tpu.memory_space<vmem>>, %arg5: memref<31x11xf32, #tpu.memory_space<vmem>>, %arg6: memref<1x11xf32, #tpu.memory_space<vmem>>, %arg7: memref<1x11xf32, #tpu.memory_space<vmem>>, %arg8: memref<1x11xf32, #tpu.memory_space<vmem>>) attributes {dimension_semantics = [#tpu.dimension_semantics<arbitrary>], iteration_bounds = array<i64: 1>, scalar_prefetch = 1 : i64, scratch_operands = 0 : i64, tpu.core_type = #tpu.core_type<tc>, window_params = [{transform_indices = @transform_0, window_bounds = array<i64: 64, 32>}, {pipeline_mode = #tpu.pipeline_mode<synchronous>, transform_indices = @transform_1, window_bounds = array<i64: 32, 31>}, {pipeline_mode = #tpu.pipeline_mode<synchronous>, transform_indices = @transform_2, window_bounds = array<i64: 1, 31>}, {pipeline_mode = #tpu.pipeline_mode<synchronous>, transform_indices = @transform_3, window_bounds = array<i64: 31, 11>}, {pipeline_mode = #tpu.pipeline_mode<synchronous>, transform_indices = @transform_4, window_bounds = array<i64: 1, 11>}, {pipeline_mode = #tpu.pipeline_mode<synchronous>, transform_indices = @transform_5, window_bounds = array<i64: 1, 11>}, {pipeline_mode = #tpu.pipeline_mode<synchronous>, transform_indices = @transform_6, window_bounds = array<i64: 1, 11>}]} {
    %c0_i32 = arith.constant 0 : i32
    %0 = arith.cmpi eq, %arg0, %c0_i32 : i32
    %1 = arith.extui %0 : i1 to i32
    %c0_i32_0 = arith.constant 0 : i32
    %2 = arith.cmpi ne, %1, %c0_i32_0 : i32
    scf.if %2 {
      %cst_26 = arith.constant 0.000000e+00 : f32
      %39 = vector.broadcast %cst_26 : f32 to vector<1x11xf32>
      %c0_27 = arith.constant 0 : index
      %c0_28 = arith.constant 0 : index
      %40 = vector.load %arg7[%c0_27, %c0_28] : memref<1x11xf32, #tpu.memory_space<vmem>>, vector<1x11xf32>
      tpu.vector_store %arg7[%c0_27, %c0_28], %39 {strides = array<i32>} : memref<1x11xf32, #tpu.memory_space<vmem>>, vector<1x11xf32>,
      %cst_29 = arith.constant 0.000000e+00 : f32
      %41 = vector.broadcast %cst_29 : f32 to vector<1x11xf32>
      %c0_30 = arith.constant 0 : index
      %c0_31 = arith.constant 0 : index
      %42 = vector.load %arg8[%c0_30, %c0_31] : memref<1x11xf32, #tpu.memory_space<vmem>>, vector<1x11xf32>
      tpu.vector_store %arg8[%c0_30, %c0_31], %41 {strides = array<i32>} : memref<1x11xf32, #tpu.memory_space<vmem>>, vector<1x11xf32>,
    } else {
    }
    %c0 = arith.constant 0 : index
    %c0_1 = arith.constant 0 : index
    %3 = vector.load %arg2[%c0, %c0_1] : memref<64x32xf32, #tpu.memory_space<vmem>>, vector<64x32xf32>
    %c0_2 = arith.constant 0 : index
    %c0_3 = arith.constant 0 : index
    %4 = vector.load %arg3[%c0_2, %c0_3] : memref<32x31xf32, #tpu.memory_space<vmem>>, vector<32x31xf32>
    %c0_4 = arith.constant 0 : index
    %c0_5 = arith.constant 0 : index
    %5 = vector.load %arg4[%c0_4, %c0_5] : memref<1x31xf32, #tpu.memory_space<vmem>>, vector<1x31xf32>
    %cst = arith.constant dense<0.000000e+00> : vector<64x31xf32>
    %6 = tpu.matmul %3, %4, %cst {dimension_numbers = #tpu.dot_dimension_numbers<[1], [0], [0], [1], [0, 0, 1, 1], [], []>} : vector<64x32xf32>, vector<32x31xf32>, vector<64x31xf32> -> vector<64x31xf32>
    %7 = vector.broadcast %5 : vector<1x31xf32> to vector<64x31xf32>
    %8 = arith.addf %6, %7 : vector<64x31xf32>
    %cst_6 = arith.constant 0.000000e+00 : f32
    %9 = vector.broadcast %cst_6 : f32 to vector<64x31xf32>
    %10 = arith.maximumf %8, %9 : vector<64x31xf32>
    %c0_7 = arith.constant 0 : index
    %c0_8 = arith.constant 0 : index
    %11 = vector.load %arg5[%c0_7, %c0_8] : memref<31x11xf32, #tpu.memory_space<vmem>>, vector<31x11xf32>
    %c0_9 = arith.constant 0 : index
    %c0_10 = arith.constant 0 : index
    %12 = vector.load %arg6[%c0_9, %c0_10] : memref<1x11xf32, #tpu.memory_space<vmem>>, vector<1x11xf32>
    %cst_11 = arith.constant dense<0.000000e+00> : vector<64x11xf32>
    %13 = tpu.matmul %10, %11, %cst_11 {dimension_numbers = #tpu.dot_dimension_numbers<[1], [0], [0], [1], [0, 0, 1, 1], [], []>} : vector<64x31xf32>, vector<31x11xf32>, vector<64x11xf32> -> vector<64x11xf32>
    %14 = vector.broadcast %12 : vector<1x11xf32> to vector<64x11xf32>
    %15 = arith.addf %13, %14 : vector<64x11xf32>
    %cst_12 = arith.constant 0.000000e+00 : f32
    %16 = vector.broadcast %cst_12 : f32 to vector<64x11xf32>
    %17 = arith.maximumf %15, %16 : vector<64x11xf32>
    %c64_i32 = arith.constant 64 : i32
    %18 = arith.muli %arg0, %c64_i32 : i32
    %19 = tpu.iota {dimensions = array<i32: 0>} : vector<64x1xi32>
    %20 = vector.broadcast %18 : i32 to vector<64x1xi32>
    %21 = arith.addi %20, %19 : vector<64x1xi32>
    %c0_13 = arith.constant 0 : index
    %22 = memref.load %arg1[%c0_13] : memref<1xi32, #tpu.memory_space<smem>>
    %23 = vector.broadcast %22 : i32 to vector<64x1xi32>
    %24 = arith.cmpi slt, %21, %23 : vector<64x1xi32>
    %cst_14 = arith.constant 0.000000e+00 : f32
    %25 = vector.shape_cast %24 : vector<64x1xi1> to vector<64x1xi1>
    %26 = vector.broadcast %25 : vector<64x1xi1> to vector<64x11xi1>
    %27 = vector.broadcast %cst_14 : f32 to vector<64x11xf32>
    %28 = arith.select %26, %17, %27 : vector<64x11xi1>, vector<64x11xf32>
    %cst_15 = arith.constant 1.000000e+00 : f32
    %29 = vector.broadcast %cst_15 : f32 to vector<1x64xf32>
    %c0_16 = arith.constant 0 : index
    %c0_17 = arith.constant 0 : index
    %30 = vector.load %arg7[%c0_16, %c0_17] : memref<1x11xf32, #tpu.memory_space<vmem>>, vector<1x11xf32>
    %cst_18 = arith.constant dense<0.000000e+00> : vector<1x11xf32>
    %31 = tpu.matmul %29, %28, %cst_18 {dimension_numbers = #tpu.dot_dimension_numbers<[1], [0], [0], [1], [0, 0, 1, 1], [], []>} : vector<1x64xf32>, vector<64x11xf32>, vector<1x11xf32> -> vector<1x11xf32>
    %32 = arith.addf %30, %31 : vector<1x11xf32>
    %c0_19 = arith.constant 0 : index
    %c0_20 = arith.constant 0 : index
    %33 = vector.load %arg7[%c0_19, %c0_20] : memref<1x11xf32, #tpu.memory_space<vmem>>, vector<1x11xf32>
    tpu.vector_store %arg7[%c0_19, %c0_20], %32 {strides = array<i32>} : memref<1x11xf32, #tpu.memory_space<vmem>>, vector<1x11xf32>,
    %c0_21 = arith.constant 0 : index
    %c0_22 = arith.constant 0 : index
    %34 = vector.load %arg8[%c0_21, %c0_22] : memref<1x11xf32, #tpu.memory_space<vmem>>, vector<1x11xf32>
    %35 = arith.mulf %28, %28 : vector<64x11xf32>
    %cst_23 = arith.constant dense<0.000000e+00> : vector<1x11xf32>
    %36 = tpu.matmul %29, %35, %cst_23 {dimension_numbers = #tpu.dot_dimension_numbers<[1], [0], [0], [1], [0, 0, 1, 1], [], []>} : vector<1x64xf32>, vector<64x11xf32>, vector<1x11xf32> -> vector<1x11xf32>
    %37 = arith.addf %34, %36 : vector<1x11xf32>
    %c0_24 = arith.constant 0 : index
    %c0_25 = arith.constant 0 : index
    %38 = vector.load %arg8[%c0_24, %c0_25] : memref<1x11xf32, #tpu.memory_space<vmem>>, vector<1x11xf32>
    tpu.vector_store %arg8[%c0_24, %c0_25], %37 {strides = array<i32>} : memref<1x11xf32, #tpu.memory_space<vmem>>, vector<1x11xf32>,
    return
  }
  func.func @transform_0(%arg0: i32, %arg1: memref<1xi32, #tpu.memory_space<smem>>) -> (i32, i32) {
    %c0_i32 = arith.constant 0 : i32
    %c0_i32_0 = arith.constant 0 : i32
    return %arg0, %c0_i32 : i32, i32
  }
  func.func @transform_1(%arg0: i32, %arg1: memref<1xi32, #tpu.memory_space<smem>>) -> (i32, i32) {
    %c0_i32 = arith.constant 0 : i32
    %c0_i32_0 = arith.constant 0 : i32
    %c0_i32_1 = arith.constant 0 : i32
    return %c0_i32, %c0_i32_0 : i32, i32
  }
  func.func @transform_2(%arg0: i32, %arg1: memref<1xi32, #tpu.memory_space<smem>>) -> (i32, i32) {
    %c0_i32 = arith.constant 0 : i32
    %c0_i32_0 = arith.constant 0 : i32
    %c0_i32_1 = arith.constant 0 : i32
    return %c0_i32, %c0_i32_0 : i32, i32
  }
  func.func @transform_3(%arg0: i32, %arg1: memref<1xi32, #tpu.memory_space<smem>>) -> (i32, i32) {
    %c0_i32 = arith.constant 0 : i32
    %c0_i32_0 = arith.constant 0 : i32
    %c0_i32_1 = arith.constant 0 : i32
    return %c0_i32, %c0_i32_0 : i32, i32
  }
  func.func @transform_4(%arg0: i32, %arg1: memref<1xi32, #tpu.memory_space<smem>>) -> (i32, i32) {
    %c0_i32 = arith.constant 0 : i32
    %c0_i32_0 = arith.constant 0 : i32
    %c0_i32_1 = arith.constant 0 : i32
    return %c0_i32, %c0_i32_0 : i32, i32
  }
  func.func @transform_5(%arg0: i32, %arg1: memref<1xi32, #tpu.memory_space<smem>>) -> (i32, i32) {
    %c0_i32 = arith.constant 0 : i32
    %c0_i32_0 = arith.constant 0 : i32
    %c0_i32_1 = arith.constant 0 : i32
    return %c0_i32, %c0_i32_0 : i32, i32
  }
  func.func @transform_6(%arg0: i32, %arg1: memref<1xi32, #tpu.memory_space<smem>>) -> (i32, i32) {
    %c0_i32 = arith.constant 0 : i32
    %c0_i32_0 = arith.constant 0 : i32
    %c0_i32_1 = arith.constant 0 : i32
    return %c0_i32, %c0_i32_0 : i32, i32
  }
}

module attributes {stable_mosaic.version = 11 : i64} {
  func.func @_forward_kernel(%arg0: i32, %arg1: memref<64x32xf32, #tpu.memory_space<vmem>>, %arg2: memref<32x31xf32, #tpu.memory_space<vmem>>, %arg3: memref<1x31xf32, #tpu.memory_space<vmem>>, %arg4: memref<31x11xf32, #tpu.memory_space<vmem>>, %arg5: memref<1x11xf32, #tpu.memory_space<vmem>>, %arg6: memref<11x3xf32, #tpu.memory_space<vmem>>, %arg7: memref<1x3xf32, #tpu.memory_space<vmem>>, %arg8: memref<1x3xf32, #tpu.memory_space<vmem>>, %arg9: memref<1x1xf32, #tpu.memory_space<vmem>>, %arg10: memref<1x64xf32, #tpu.memory_space<vmem>>) attributes {dimension_semantics = [#tpu.dimension_semantics<parallel>], iteration_bounds = array<i64: 1>, scalar_prefetch = 0 : i64, scratch_operands = 0 : i64, tpu.core_type = #tpu.core_type<tc>, window_params = [{transform_indices = @transform_0, window_bounds = array<i64: 64, 32>}, {pipeline_mode = #tpu.pipeline_mode<synchronous>, transform_indices = @transform_1, window_bounds = array<i64: 32, 31>}, {pipeline_mode = #tpu.pipeline_mode<synchronous>, transform_indices = @transform_2, window_bounds = array<i64: 1, 31>}, {pipeline_mode = #tpu.pipeline_mode<synchronous>, transform_indices = @transform_3, window_bounds = array<i64: 31, 11>}, {pipeline_mode = #tpu.pipeline_mode<synchronous>, transform_indices = @transform_4, window_bounds = array<i64: 1, 11>}, {pipeline_mode = #tpu.pipeline_mode<synchronous>, transform_indices = @transform_5, window_bounds = array<i64: 11, 3>}, {pipeline_mode = #tpu.pipeline_mode<synchronous>, transform_indices = @transform_6, window_bounds = array<i64: 1, 3>}, {pipeline_mode = #tpu.pipeline_mode<synchronous>, transform_indices = @transform_7, window_bounds = array<i64: 1, 3>}, {pipeline_mode = #tpu.pipeline_mode<synchronous>, transform_indices = @transform_8, window_bounds = array<i64: 1, 1>}, {transform_indices = @transform_9, window_bounds = array<i64: 1, 64>}]} {
    %c0 = arith.constant 0 : index
    %c0_0 = arith.constant 0 : index
    %0 = vector.load %arg1[%c0, %c0_0] : memref<64x32xf32, #tpu.memory_space<vmem>>, vector<64x32xf32>
    %c0_1 = arith.constant 0 : index
    %c0_2 = arith.constant 0 : index
    %1 = vector.load %arg2[%c0_1, %c0_2] : memref<32x31xf32, #tpu.memory_space<vmem>>, vector<32x31xf32>
    %cst = arith.constant dense<0.000000e+00> : vector<64x31xf32>
    %2 = tpu.matmul %0, %1, %cst {dimension_numbers = #tpu.dot_dimension_numbers<[1], [0], [0], [1], [0, 0, 1, 1], [], []>} : vector<64x32xf32>, vector<32x31xf32>, vector<64x31xf32> -> vector<64x31xf32>
    %c0_3 = arith.constant 0 : index
    %c0_4 = arith.constant 0 : index
    %3 = vector.load %arg3[%c0_3, %c0_4] : memref<1x31xf32, #tpu.memory_space<vmem>>, vector<1x31xf32>
    %4 = vector.broadcast %3 : vector<1x31xf32> to vector<64x31xf32>
    %5 = arith.addf %2, %4 : vector<64x31xf32>
    %cst_5 = arith.constant 0.000000e+00 : f32
    %6 = vector.broadcast %cst_5 : f32 to vector<64x31xf32>
    %7 = arith.maximumf %5, %6 : vector<64x31xf32>
    %c0_6 = arith.constant 0 : index
    %c0_7 = arith.constant 0 : index
    %8 = vector.load %arg4[%c0_6, %c0_7] : memref<31x11xf32, #tpu.memory_space<vmem>>, vector<31x11xf32>
    %cst_8 = arith.constant dense<0.000000e+00> : vector<64x11xf32>
    %9 = tpu.matmul %7, %8, %cst_8 {dimension_numbers = #tpu.dot_dimension_numbers<[1], [0], [0], [1], [0, 0, 1, 1], [], []>} : vector<64x31xf32>, vector<31x11xf32>, vector<64x11xf32> -> vector<64x11xf32>
    %c0_9 = arith.constant 0 : index
    %c0_10 = arith.constant 0 : index
    %10 = vector.load %arg5[%c0_9, %c0_10] : memref<1x11xf32, #tpu.memory_space<vmem>>, vector<1x11xf32>
    %11 = vector.broadcast %10 : vector<1x11xf32> to vector<64x11xf32>
    %12 = arith.addf %9, %11 : vector<64x11xf32>
    %cst_11 = arith.constant 0.000000e+00 : f32
    %13 = vector.broadcast %cst_11 : f32 to vector<64x11xf32>
    %14 = arith.maximumf %12, %13 : vector<64x11xf32>
    %c0_12 = arith.constant 0 : index
    %c0_13 = arith.constant 0 : index
    %15 = vector.load %arg6[%c0_12, %c0_13] : memref<11x3xf32, #tpu.memory_space<vmem>>, vector<11x3xf32>
    %cst_14 = arith.constant dense<0.000000e+00> : vector<64x3xf32>
    %16 = tpu.matmul %14, %15, %cst_14 {dimension_numbers = #tpu.dot_dimension_numbers<[1], [0], [0], [1], [0, 0, 1, 1], [], []>} : vector<64x11xf32>, vector<11x3xf32>, vector<64x3xf32> -> vector<64x3xf32>
    %c0_15 = arith.constant 0 : index
    %c0_16 = arith.constant 0 : index
    %17 = vector.load %arg7[%c0_15, %c0_16] : memref<1x3xf32, #tpu.memory_space<vmem>>, vector<1x3xf32>
    %18 = vector.broadcast %17 : vector<1x3xf32> to vector<64x3xf32>
    %19 = arith.addf %16, %18 : vector<64x3xf32>
    %cst_17 = arith.constant 0.000000e+00 : f32
    %20 = vector.broadcast %cst_17 : f32 to vector<64x3xf32>
    %21 = arith.maximumf %19, %20 : vector<64x3xf32>
    %c0_18 = arith.constant 0 : index
    %c0_19 = arith.constant 0 : index
    %22 = vector.load %arg8[%c0_18, %c0_19] : memref<1x3xf32, #tpu.memory_space<vmem>>, vector<1x3xf32>
    %cst_20 = arith.constant dense<0.000000e+00> : vector<1x64xf32>
    %23 = tpu.matmul %22, %21, %cst_20 {dimension_numbers = #tpu.dot_dimension_numbers<[1], [1], [0], [0], [0, 0, 1, 0], [], []>} : vector<1x3xf32>, vector<64x3xf32>, vector<1x64xf32> -> vector<1x64xf32>
    %c0_21 = arith.constant 0 : index
    %c0_22 = arith.constant 0 : index
    %24 = vector.load %arg9[%c0_21, %c0_22] : memref<1x1xf32, #tpu.memory_space<vmem>>, vector<1x1xf32>
    %25 = vector.broadcast %24 : vector<1x1xf32> to vector<1x64xf32>
    %26 = arith.addf %23, %25 : vector<1x64xf32>
    %c0_23 = arith.constant 0 : index
    %c0_24 = arith.constant 0 : index
    %27 = vector.load %arg10[%c0_23, %c0_24] : memref<1x64xf32, #tpu.memory_space<vmem>>, vector<1x64xf32>
    tpu.vector_store %arg10[%c0_23, %c0_24], %26 {strides = array<i32>} : memref<1x64xf32, #tpu.memory_space<vmem>>, vector<1x64xf32>,
    return
  }
  func.func @transform_0(%arg0: i32) -> (i32, i32) {
    %c0_i32 = arith.constant 0 : i32
    %c0_i32_0 = arith.constant 0 : i32
    return %arg0, %c0_i32 : i32, i32
  }
  func.func @transform_1(%arg0: i32) -> (i32, i32) {
    %c0_i32 = arith.constant 0 : i32
    %c0_i32_0 = arith.constant 0 : i32
    %c0_i32_1 = arith.constant 0 : i32
    return %c0_i32, %c0_i32_0 : i32, i32
  }
  func.func @transform_2(%arg0: i32) -> (i32, i32) {
    %c0_i32 = arith.constant 0 : i32
    %c0_i32_0 = arith.constant 0 : i32
    %c0_i32_1 = arith.constant 0 : i32
    return %c0_i32, %c0_i32_0 : i32, i32
  }
  func.func @transform_3(%arg0: i32) -> (i32, i32) {
    %c0_i32 = arith.constant 0 : i32
    %c0_i32_0 = arith.constant 0 : i32
    %c0_i32_1 = arith.constant 0 : i32
    return %c0_i32, %c0_i32_0 : i32, i32
  }
  func.func @transform_4(%arg0: i32) -> (i32, i32) {
    %c0_i32 = arith.constant 0 : i32
    %c0_i32_0 = arith.constant 0 : i32
    %c0_i32_1 = arith.constant 0 : i32
    return %c0_i32, %c0_i32_0 : i32, i32
  }
  func.func @transform_5(%arg0: i32) -> (i32, i32) {
    %c0_i32 = arith.constant 0 : i32
    %c0_i32_0 = arith.constant 0 : i32
    %c0_i32_1 = arith.constant 0 : i32
    return %c0_i32, %c0_i32_0 : i32, i32
  }
  func.func @transform_6(%arg0: i32) -> (i32, i32) {
    %c0_i32 = arith.constant 0 : i32
    %c0_i32_0 = arith.constant 0 : i32
    %c0_i32_1 = arith.constant 0 : i32
    return %c0_i32, %c0_i32_0 : i32, i32
  }
  func.func @transform_7(%arg0: i32) -> (i32, i32) {
    %c0_i32 = arith.constant 0 : i32
    %c0_i32_0 = arith.constant 0 : i32
    %c0_i32_1 = arith.constant 0 : i32
    return %c0_i32, %c0_i32_0 : i32, i32
  }
  func.func @transform_8(%arg0: i32) -> (i32, i32) {
    %c0_i32 = arith.constant 0 : i32
    %c0_i32_0 = arith.constant 0 : i32
    %c0_i32_1 = arith.constant 0 : i32
    return %c0_i32, %c0_i32_0 : i32, i32
  }
  func.func @transform_9(%arg0: i32) -> (i32, i32) {
    %c0_i32 = arith.constant 0 : i32
    %c0_i32_0 = arith.constant 0 : i32
    return %c0_i32, %arg0 : i32, i32
  }
}

</mosaic_0001>

<llo_original>
// kernel: basenet_forward.4
$region0: #{basenet_forward.4}
  #allocation0 [shape = 'u32[]', space=smem, size = 0x4, offset = 0x4, fixed_abs, tag = 'smem constant byte address 0x4 - core index']
  #allocation1 [shape = 'u32[144,128]{1,0:T(1,128)}', space=vmem, size = 0x12000, scoped, tag = 'internal scratch']
  #allocation2 [shape = 's32[1]{0}', space=sflag, size = 0x4, scoped, tag = 'scoped memory for basenet_forward.4']
  #allocation3 [shape = 's32[1]{0:T(128)S(6)}', space=smem, size = 0x200, scoped, tag = 'prefetched SMEM operand 0']
  %s0 = inlined_call_operand.<no memory space> [shape: s32[1], index: 0, kind: input, shape index: {}]
  %s1 = inlined_call_operand.vmem [shape: f32[64,32], index: 1, kind: input, shape index: {}]
  %s2 = inlined_call_operand.vmem [shape: f32[1,32], index: 2, kind: output, shape index: {0}]
  %s3 = inlined_call_operand.vmem [shape: f32[1,32], index: 3, kind: output, shape index: {1}]
  %4 = xla_tuple %s2, %s3
  %s5 = sld [smem:[#allocation0]]
  $region26: #{basenet_forward.4} parent=0
    _
  %s7 = ssub.s32 1, %s5
  %s8 = scalar_select 0, %s7, %s5
  %9 = sst [smem:[#allocation3]] %s0
  // Predicated region
  $region2: #{basenet_forward.4} parent=0 // pred_check
    _
  $region3: #{basenet_forward.4} parent=0 // pred_check_branch
    %11 = sbr.rel (0) target = $region5
  $region4: #{basenet_forward.4} parent=0 // pred_region
    _
  $region5: #{basenet_forward.4} parent=0 // pred_fallthru
    _
  %p12 = scmp.eq.s32.totalorder 0, 0
  // Predicated region
  $region6: #{basenet_forward.4} parent=0 // pred_check
    %p13 = pneg %p12
  $region7: #{basenet_forward.4} parent=0 // pred_check_branch
    %15 = sbr.rel (%p13) target = $region9
  $region8: #{basenet_forward.4} parent=0 // pred_region
    %vm16 = vcmask 253952
    %17 = vst.msk [vmem:[%s2] sm:$0x1] %vm16, 0.0
    %18 = vst.msk [vmem:[%s3] sm:$0x1] %vm16, 0.0
  $region9: #{basenet_forward.4} parent=0 // pred_fallthru
    _
  %v19 = vld [vmem:[%s1] sm:$0xff]
  %v20 = vld [vmem:[%s1 + $0x8] sm:$0xff]
  %v21 = vld [vmem:[%s1 + $0x10] sm:$0xff]
  %v22 = vld [vmem:[%s1 + $0x18] sm:$0xff]
  %v23 = vld [vmem:[%s1 + $0x20] sm:$0xff]
  %v24 = vld [vmem:[%s1 + $0x28] sm:$0xff]
  %v25 = vld [vmem:[%s1 + $0x30] sm:$0xff]
  %v26 = vld [vmem:[%s1 + $0x38] sm:$0xff]
  %s27 = smul.u32 0, 64
  %v28 = vlaneseq
  %v29 = vshrl.u32 %v28, 7
  %v30 = vadd.s32 %v29, 8
  %v31 = vadd.s32 %v29, 16
  %v32 = vadd.s32 %v29, 24
  %v33 = vadd.s32 %v29, 32
  %v34 = vadd.s32 %v29, 40
  %v35 = vadd.s32 %v29, 48
  %v36 = vadd.s32 %v29, 56
  %v37 = vstv %s27
  %v38 = vadd.s32 %v37, %v29
  %v39 = vadd.s32 %v37, %v30
  %v40 = vadd.s32 %v37, %v31
  %v41 = vadd.s32 %v37, %v32
  %v42 = vadd.s32 %v37, %v33
  %v43 = vadd.s32 %v37, %v34
  %v44 = vadd.s32 %v37, %v35
  %v45 = vadd.s32 %v37, %v36
  %s46 = sld [smem:[#allocation3]]
  %v47 = vstv %s46
  %vm48 = vcmp.lt.s32.totalorder %v38, %v47
  %vm49 = vcmp.lt.s32.totalorder %v39, %v47
  %vm50 = vcmp.lt.s32.totalorder %v40, %v47
  %vm51 = vcmp.lt.s32.totalorder %v41, %v47
  %vm52 = vcmp.lt.s32.totalorder %v42, %v47
  %vm53 = vcmp.lt.s32.totalorder %v43, %v47
  %vm54 = vcmp.lt.s32.totalorder %v44, %v47
  %vm55 = vcmp.lt.s32.totalorder %v45, %v47
  %v56 = vsel %vm48, 1, 0
  %v57 = vsel %vm49, 1, 0
  %v58 = vsel %vm50, 1, 0
  %v59 = vsel %vm51, 1, 0
  %v60 = vsel %vm52, 1, 0
  %v61 = vsel %vm53, 1, 0
  %v62 = vsel %vm54, 1, 0
  %v63 = vsel %vm55, 1, 0
  %vm64 = vcmp.eq.s32.totalorder %v56, 1
  %vm65 = vcmp.eq.s32.totalorder %v57, 1
  %vm66 = vcmp.eq.s32.totalorder %v58, 1
  %vm67 = vcmp.eq.s32.totalorder %v59, 1
  %vm68 = vcmp.eq.s32.totalorder %v60, 1
  %vm69 = vcmp.eq.s32.totalorder %v61, 1
  %vm70 = vcmp.eq.s32.totalorder %v62, 1
  %vm71 = vcmp.eq.s32.totalorder %v63, 1
  %v72 = vsel %vm64, %v19, 0.0
  %v73 = vsel %vm65, %v20, 0.0
  %v74 = vsel %vm66, %v21, 0.0
  %v75 = vsel %vm67, %v22, 0.0
  %v76 = vsel %vm68, %v23, 0.0
  %v77 = vsel %vm69, %v24, 0.0
  %v78 = vsel %vm70, %v25, 0.0
  %v79 = vsel %vm71, %v26, 0.0
  %v80 = vld [vmem:[%s2] sm:$0x1]
  %vm81 = vcmask 523264
  %v83 = vsel %vm81, 1.0, 0
  %85 = vmatprep.subr.mxu0 0.0
  %86 = vmatpush1.msra.mxu0 %v72
  %87 = vmatprep.subr.mxu0 0.0
  %88 = vmatpush1.msra.mxu0 %v73
  %89 = vmatprep.subr.mxu0 0.0
  %90 = vmatpush1.msra.mxu0 %v74
  %91 = vmatprep.subr.mxu0 0.0
  %92 = vmatpush1.msra.mxu0 %v75
  %93 = vmatprep.subr.mxu0 0.0
  %94 = vmatpush1.msra.mxu0 %v76
  %95 = vmatprep.subr.mxu0 0.0
  %96 = vmatpush1.msra.mxu0 %v77
  %97 = vmatprep.subr.mxu0 0.0
  %98 = vmatpush1.msra.mxu0 %v78
  %99 = vmatprep.subr.mxu0 0.0
  %100 = vmatpush1.msra.mxu0 %v79
  %101 = vmatprep.subr.mxu0 0.0
  %102 = vmatpush1.msra.mxu0 0.0
  %103 = vmatprep.subr.mxu0 0.0
  %104 = vmatpush1.msra.mxu0 0.0
  %105 = vmatprep.subr.mxu0 0.0
  %106 = vmatpush1.msra.mxu0 0.0
  %107 = vmatprep.subr.mxu0 0.0
  %108 = vmatpush1.msra.mxu0 0.0
  %109 = vmatprep.subr.mxu0 0.0
  %110 = vmatpush1.msra.mxu0 0.0
  %111 = vmatprep.subr.mxu0 0.0
  %112 = vmatpush1.msra.mxu0 0.0
  %113 = vmatprep.subr.mxu0 0.0
  %114 = vmatpush1.msra.mxu0 0.0
  %115 = vmatprep.subr.mxu0 0.0
  %116 = vmatpush1.msra.mxu0 0.0
  %117 = vmatprep.subr.mxu0 0.0
  %118 = vmatpush1.msra.mxu0 0.0
  %119 = vmatprep.subr.mxu0 0.0
  %120 = vmatpush1.msra.mxu0 0.0
  %121 = vmatprep.subr.mxu0 0.0
  %122 = vmatpush1.msra.mxu0 0.0
  %123 = vmatprep.subr.mxu0 0.0
  %124 = vmatpush1.msra.mxu0 0.0
  %125 = vmatprep.subr.mxu0 0.0
  %126 = vmatpush1.msra.mxu0 0.0
  %127 = vmatprep.subr.mxu0 0.0
  %128 = vmatpush1.msra.mxu0 0.0
  %129 = vmatprep.subr.mxu0 0.0
  %130 = vmatpush1.msra.mxu0 0.0
  %131 = vmatprep.subr.mxu0 0.0
  %132 = vmatpush1.msra.mxu0 0.0
  %133 = vmatprep.subr.mxu0 0.0
  %134 = vmatpush1.msra.mxu0 0.0
  %135 = vmatprep.subr.mxu0 0.0
  %136 = vmatpush1.msra.mxu0 0.0
  %137 = vmatprep.subr.mxu0 0.0
  %138 = vmatpush1.msra.mxu0 0.0
  %139 = vmatprep.subr.mxu0 0.0
  %140 = vmatpush1.msra.mxu0 0.0
  %141 = vmatprep.subr.mxu0 0.0
  %142 = vmatpush1.msra.mxu0 0.0
  %143 = vmatprep.subr.mxu0 0.0
  %144 = vmatpush1.msra.mxu0 0.0
  %145 = vmatprep.subr.mxu0 0.0
  %146 = vmatpush1.msra.mxu0 0.0
  %147 = vmatprep.subr.mxu0 0.0
  %148 = vmatpush1.msra.mxu0 0.0
  %149 = vmatprep.mubr.f32.mxu0 0.0
  %150 = vmatmul.mubr.f32.gmra.mrb[0].mxu0 %v83
  %v151 = vpop.f32.mrb[0].mxu0
  %v152 = vadd.f32 0.0, %v151
  %v153 = vpop.f32.mrb[0].mxu0
  %154 = vdwg.mxu0
  %v155 = vadd.f32 %v80, %v152
  %vm156 = vcmask 253952
  %157 = vst.msk [vmem:[%s2] sm:$0x1] %vm156, %v155
  %v158 = vld [vmem:[%s3] sm:$0x1]
  %v159 = vmul.f32 %v72, %v72
  %v160 = vmul.f32 %v73, %v73
  %v161 = vmul.f32 %v74, %v74
  %v162 = vmul.f32 %v75, %v75
  %v163 = vmul.f32 %v76, %v76
  %v164 = vmul.f32 %v77, %v77
  %v165 = vmul.f32 %v78, %v78
  %v166 = vmul.f32 %v79, %v79
  %167 = vmatprep.subr.mxu0 0.0
  %168 = vmatpush1.msra.mxu0 %v159
  %169 = vmatprep.subr.mxu0 0.0
  %170 = vmatpush1.msra.mxu0 %v160
  %171 = vmatprep.subr.mxu0 0.0
  %172 = vmatpush1.msra.mxu0 %v161
  %173 = vmatprep.subr.mxu0 0.0
  %174 = vmatpush1.msra.mxu0 %v162
  %175 = vmatprep.subr.mxu0 0.0
  %176 = vmatpush1.msra.mxu0 %v163
  %177 = vmatprep.subr.mxu0 0.0
  %178 = vmatpush1.msra.mxu0 %v164
  %179 = vmatprep.subr.mxu0 0.0
  %180 = vmatpush1.msra.mxu0 %v165
  %181 = vmatprep.subr.mxu0 0.0
  %182 = vmatpush1.msra.mxu0 %v166
  %183 = vmatprep.subr.mxu0 0.0
  %184 = vmatpush1.msra.mxu0 0.0
  %185 = vmatprep.subr.mxu0 0.0
  %186 = vmatpush1.msra.mxu0 0.0
  %187 = vmatprep.subr.mxu0 0.0
  %188 = vmatpush1.msra.mxu0 0.0
  %189 = vmatprep.subr.mxu0 0.0
  %190 = vmatpush1.msra.mxu0 0.0
  %191 = vmatprep.subr.mxu0 0.0
  %192 = vmatpush1.msra.mxu0 0.0
  %193 = vmatprep.subr.mxu0 0.0
  %194 = vmatpush1.msra.mxu0 0.0
  %195 = vmatprep.subr.mxu0 0.0
  %196 = vmatpush1.msra.mxu0 0.0
  %197 = vmatprep.subr.mxu0 0.0
  %198 = vmatpush1.msra.mxu0 0.0
  %199 = vmatprep.subr.mxu0 0.0
  %200 = vmatpush1.msra.mxu0 0.0
  %201 = vmatprep.subr.mxu0 0.0
  %202 = vmatpush1.msra.mxu0 0.0
  %203 = vmatprep.subr.mxu0 0.0
  %204 = vmatpush1.msra.mxu0 0.0
  %205 = vmatprep.subr.mxu0 0.0
  %206 = vmatpush1.msra.mxu0 0.0
  %207 = vmatprep.subr.mxu0 0.0
  %208 = vmatpush1.msra.mxu0 0.0
  %209 = vmatprep.subr.mxu0 0.0
  %210 = vmatpush1.msra.mxu0 0.0
  %211 = vmatprep.subr.mxu0 0.0
  %212 = vmatpush1.msra.mxu0 0.0
  %213 = vmatprep.subr.mxu0 0.0
  %214 = vmatpush1.msra.mxu0 0.0
  %215 = vmatprep.subr.mxu0 0.0
  %216 = vmatpush1.msra.mxu0 0.0
  %217 = vmatprep.subr.mxu0 0.0
  %218 = vmatpush1.msra.mxu0 0.0
  %219 = vmatprep.subr.mxu0 0.0
  %220 = vmatpush1.msra.mxu0 0.0
  %221 = vmatprep.subr.mxu0 0.0
  %222 = vmatpush1.msra.mxu0 0.0
  %223 = vmatprep.subr.mxu0 0.0
  %224 = vmatpush1.msra.mxu0 0.0
  %225 = vmatprep.subr.mxu0 0.0
  %226 = vmatpush1.msra.mxu0 0.0
  %227 = vmatprep.subr.mxu0 0.0
  %228 = vmatpush1.msra.mxu0 0.0
  %229 = vmatprep.subr.mxu0 0.0
  %230 = vmatpush1.msra.mxu0 0.0
  %231 = vmatprep.mubr.f32.mxu0 0.0
  %232 = vmatmul.mubr.f32.gmra.mrb[0].mxu0 %v83
  %v233 = vpop.f32.mrb[0].mxu0
  %v234 = vadd.f32 0.0, %v233
  %v235 = vpop.f32.mrb[0].mxu0
  %236 = vdwg.mxu0
  %v237 = vadd.f32 %v158, %v234
  %238 = vst.msk [vmem:[%s3] sm:$0x1] %vm156, %v237
  // Predicated region
  $region10: #{basenet_forward.4} parent=0 // pred_check
    _
  $region11: #{basenet_forward.4} parent=0 // pred_check_branch
    %240 = sbr.rel (0) target = $region13
  $region12: #{basenet_forward.4} parent=0 // pred_region
    _
  $region13: #{basenet_forward.4} parent=0 // pred_fallthru
    _
  // Predicated region
  $region14: #{basenet_forward.4} parent=0 // pred_check
    _
  $region15: #{basenet_forward.4} parent=0 // pred_check_branch
    %242 = sbr.rel (0) target = $region17
  $region16: #{basenet_forward.4} parent=0 // pred_region
    _
  $region17: #{basenet_forward.4} parent=0 // pred_fallthru
    _
  // Predicated region
  $region18: #{basenet_forward.4} parent=0 // pred_check
    _
  $region19: #{basenet_forward.4} parent=0 // pred_check_branch
    %244 = sbr.rel (0) target = $region21
  $region20: #{basenet_forward.4} parent=0 // pred_region
    _
  $region21: #{basenet_forward.4} parent=0 // pred_fallthru
    _
  // Predicated region
  $region22: #{basenet_forward.4} parent=0 // pred_check
    _
  $region23: #{basenet_forward.4} parent=0 // pred_check_branch
    %246 = sbr.rel (0) target = $region25
  $region24: #{basenet_forward.4} parent=0 // pred_region
    _
  $region25: #{basenet_forward.4} parent=0 // pred_fallthru
    _

// kernel: basenet_forward.5
$region0: #{basenet_forward.5}
  #allocation0 [shape = 'u32[]', space=smem, size = 0x4, offset = 0x4, fixed_abs, tag = 'smem constant byte address 0x4 - core index']
  #allocation1 [shape = 'u32[144,128]{1,0:T(1,128)}', space=vmem, size = 0x12000, scoped, tag = 'internal scratch']
  #allocation2 [shape = 's32[1]{0}', space=sflag, size = 0x4, scoped, tag = 'scoped memory for basenet_forward.5']
  #allocation3 [shape = 's32[1]{0:T(128)S(6)}', space=smem, size = 0x200, scoped, tag = 'prefetched SMEM operand 0']
  %s0 = inlined_call_operand.<no memory space> [shape: s32[1], index: 0, kind: input, shape index: {}]
  %s1 = inlined_call_operand.vmem [shape: f32[64,32], index: 1, kind: input, shape index: {}]
  %s2 = inlined_call_operand.vmem [shape: f32[32,31], index: 2, kind: input, shape index: {}]
  %s3 = inlined_call_operand.vmem [shape: f32[1,31], index: 3, kind: input, shape index: {}]
  %s4 = inlined_call_operand.vmem [shape: f32[1,31], index: 4, kind: output, shape index: {0}]
  %s5 = inlined_call_operand.vmem [shape: f32[1,31], index: 5, kind: output, shape index: {1}]
  %6 = xla_tuple %s4, %s5
  %s7 = sld [smem:[#allocation0]]
  $region34: #{basenet_forward.5} parent=0
    _
  %s9 = ssub.s32 1, %s7
  %s10 = scalar_select 0, %s9, %s7
  %11 = sst [smem:[#allocation3]] %s0
  // Predicated region
  $region2: #{basenet_forward.5} parent=0 // pred_check
    _
  $region3: #{basenet_forward.5} parent=0 // pred_check_branch
    %13 = sbr.rel (0) target = $region5
  $region4: #{basenet_forward.5} parent=0 // pred_region
    _
  $region5: #{basenet_forward.5} parent=0 // pred_fallthru
    _
  // Predicated region
  $region6: #{basenet_forward.5} parent=0 // pred_check
    _
  $region7: #{basenet_forward.5} parent=0 // pred_check_branch
    %15 = sbr.rel (0) target = $region9
  $region8: #{basenet_forward.5} parent=0 // pred_region
    _
  $region9: #{basenet_forward.5} parent=0 // pred_fallthru
    _
  // Predicated region
  $region10: #{basenet_forward.5} parent=0 // pred_check
    _
  $region11: #{basenet_forward.5} parent=0 // pred_check_branch
    %17 = sbr.rel (0) target = $region13
  $region12: #{basenet_forward.5} parent=0 // pred_region
    _
  $region13: #{basenet_forward.5} parent=0 // pred_fallthru
    _
  %p18 = scmp.eq.s32.totalorder 0, 0
  // Predicated region
  $region14: #{basenet_forward.5} parent=0 // pred_check
    %p19 = pneg %p18
  $region15: #{basenet_forward.5} parent=0 // pred_check_branch
    %21 = sbr.rel (%p19) target = $region17
  $region16: #{basenet_forward.5} parent=0 // pred_region
    %vm22 = vcmask 245760
    %23 = vst.msk [vmem:[%s4] sm:$0x1] %vm22, 0.0
    %24 = vst.msk [vmem:[%s5] sm:$0x1] %vm22, 0.0
  $region17: #{basenet_forward.5} parent=0 // pred_fallthru
    _
  %v25 = vld [vmem:[%s1] sm:$0xff]
  %v26 = vld [vmem:[%s1 + $0x8] sm:$0xff]
  %v27 = vld [vmem:[%s1 + $0x10] sm:$0xff]
  %v28 = vld [vmem:[%s1 + $0x18] sm:$0xff]
  %v29 = vld [vmem:[%s1 + $0x20] sm:$0xff]
  %v30 = vld [vmem:[%s1 + $0x28] sm:$0xff]
  %v31 = vld [vmem:[%s1 + $0x30] sm:$0xff]
  %v32 = vld [vmem:[%s1 + $0x38] sm:$0xff]
  %v33 = vld [vmem:[%s2] sm:$0xff]
  %v34 = vld [vmem:[%s2 + $0x8] sm:$0xff]
  %v35 = vld [vmem:[%s2 + $0x10] sm:$0xff]
  %v36 = vld [vmem:[%s2 + $0x18] sm:$0xff]
  %v37 = vld [vmem:[%s3] sm:$0x1]
  %v39 = vlaneseq
  %v40 = vshrl.u32 %v39, 7
  %v41 = vsub.s32 0, %v40
  %v42 = vrot.slane %v37, %v41
  %vm44 = vcmask 261120
  %v46 = vsel %vm44, %v25, 0
  %v49 = vsel %vm44, %v26, 0
  %v52 = vsel %vm44, %v27, 0
  %v55 = vsel %vm44, %v28, 0
  %v58 = vsel %vm44, %v29, 0
  %v61 = vsel %vm44, %v30, 0
  %v64 = vsel %vm44, %v31, 0
  %v67 = vsel %vm44, %v32, 0
  %69 = vmatprep.subr.mxu0 0.0
  %70 = vmatpush1.msra.mxu0 %v33
  %71 = vmatprep.subr.mxu0 0.0
  %72 = vmatpush1.msra.mxu0 %v34
  %73 = vmatprep.subr.mxu0 0.0
  %74 = vmatpush1.msra.mxu0 %v35
  %75 = vmatprep.subr.mxu0 0.0
  %76 = vmatpush1.msra.mxu0 %v36
  %77 = vmatprep.subr.mxu0 0.0
  %78 = vmatpush1.msra.mxu0 0.0
  %79 = vmatprep.subr.mxu0 0.0
  %80 = vmatpush1.msra.mxu0 0.0
  %81 = vmatprep.subr.mxu0 0.0
  %82 = vmatpush1.msra.mxu0 0.0
  %83 = vmatprep.subr.mxu0 0.0
  %84 = vmatpush1.msra.mxu0 0.0
  %85 = vmatprep.subr.mxu0 0.0
  %86 = vmatpush1.msra.mxu0 0.0
  %87 = vmatprep.subr.mxu0 0.0
  %88 = vmatpush1.msra.mxu0 0.0
  %89 = vmatprep.subr.mxu0 0.0
  %90 = vmatpush1.msra.mxu0 0.0
  %91 = vmatprep.subr.mxu0 0.0
  %92 = vmatpush1.msra.mxu0 0.0
  %93 = vmatprep.subr.mxu0 0.0
  %94 = vmatpush1.msra.mxu0 0.0
  %95 = vmatprep.subr.mxu0 0.0
  %96 = vmatpush1.msra.mxu0 0.0
  %97 = vmatprep.subr.mxu0 0.0
  %98 = vmatpush1.msra.mxu0 0.0
  %99 = vmatprep.subr.mxu0 0.0
  %100 = vmatpush1.msra.mxu0 0.0
  %101 = vmatprep.subr.mxu0 0.0
  %102 = vmatpush1.msra.mxu0 0.0
  %103 = vmatprep.subr.mxu0 0.0
  %104 = vmatpush1.msra.mxu0 0.0
  %105 = vmatprep.subr.mxu0 0.0
  %106 = vmatpush1.msra.mxu0 0.0
  %107 = vmatprep.subr.mxu0 0.0
  %108 = vmatpush1.msra.mxu0 0.0
  %109 = vmatprep.subr.mxu0 0.0
  %110 = vmatpush1.msra.mxu0 0.0
  %111 = vmatprep.subr.mxu0 0.0
  %112 = vmatpush1.msra.mxu0 0.0
  %113 = vmatprep.subr.mxu0 0.0
  %114 = vmatpush1.msra.mxu0 0.0
  %115 = vmatprep.subr.mxu0 0.0
  %116 = vmatpush1.msra.mxu0 0.0
  %117 = vmatprep.subr.mxu0 0.0
  %118 = vmatpush1.msra.mxu0 0.0
  %119 = vmatprep.subr.mxu0 0.0
  %120 = vmatpush1.msra.mxu0 0.0
  %121 = vmatprep.subr.mxu0 0.0
  %122 = vmatpush1.msra.mxu0 0.0
  %123 = vmatprep.subr.mxu0 0.0
  %124 = vmatpush1.msra.mxu0 0.0
  %125 = vmatprep.subr.mxu0 0.0
  %126 = vmatpush1.msra.mxu0 0.0
  %127 = vmatprep.subr.mxu0 0.0
  %128 = vmatpush1.msra.mxu0 0.0
  %129 = vmatprep.subr.mxu0 0.0
  %130 = vmatpush1.msra.mxu0 0.0
  %131 = vmatprep.subr.mxu0 0.0
  %132 = vmatpush1.msra.mxu0 0.0
  %133 = vmatprep.mubr.f32.mxu0 0.0
  %134 = vmatmul.mubr.f32.gmra.mrb[0].mxu0 %v46
  %v135 = vpop.f32.mrb[0].mxu0
  %v136 = vadd.f32 %v42, %v135
  %v137 = vpop.f32.mrb[0].mxu0
  %138 = vmatprep.mubr.f32.mxu0 0.0
  %139 = vmatmul.mubr.f32.gmra.mrb[0].mxu0 %v49
  %v140 = vpop.f32.mrb[0].mxu0
  %v141 = vadd.f32 %v42, %v140
  %v142 = vpop.f32.mrb[0].mxu0
  %143 = vmatprep.mubr.f32.mxu0 0.0
  %144 = vmatmul.mubr.f32.gmra.mrb[0].mxu0 %v52
  %v145 = vpop.f32.mrb[0].mxu0
  %v146 = vadd.f32 %v42, %v145
  %v147 = vpop.f32.mrb[0].mxu0
  %148 = vmatprep.mubr.f32.mxu0 0.0
  %149 = vmatmul.mubr.f32.gmra.mrb[0].mxu0 %v55
  %v150 = vpop.f32.mrb[0].mxu0
  %v151 = vadd.f32 %v42, %v150
  %v152 = vpop.f32.mrb[0].mxu0
  %153 = vmatprep.mubr.f32.mxu0 0.0
  %154 = vmatmul.mubr.f32.gmra.mrb[0].mxu0 %v58
  %v155 = vpop.f32.mrb[0].mxu0
  %v156 = vadd.f32 %v42, %v155
  %v157 = vpop.f32.mrb[0].mxu0
  %158 = vmatprep.mubr.f32.mxu0 0.0
  %159 = vmatmul.mubr.f32.gmra.mrb[0].mxu0 %v61
  %v160 = vpop.f32.mrb[0].mxu0
  %v161 = vadd.f32 %v42, %v160
  %v162 = vpop.f32.mrb[0].mxu0
  %163 = vmatprep.mubr.f32.mxu0 0.0
  %164 = vmatmul.mubr.f32.gmra.mrb[0].mxu0 %v64
  %v165 = vpop.f32.mrb[0].mxu0
  %v166 = vadd.f32 %v42, %v165
  %v167 = vpop.f32.mrb[0].mxu0
  %168 = vmatprep.mubr.f32.mxu0 0.0
  %169 = vmatmul.mubr.f32.gmra.mrb[0].mxu0 %v67
  %v170 = vpop.f32.mrb[0].mxu0
  %v171 = vadd.f32 %v42, %v170
  %v172 = vpop.f32.mrb[0].mxu0
  %173 = vdwg.mxu0
  %v174 = vmax.f32 %v136, 0.0
  %v175 = vmax.f32 %v141, 0.0
  %v176 = vmax.f32 %v146, 0.0
  %v177 = vmax.f32 %v151, 0.0
  %v178 = vmax.f32 %v156, 0.0
  %v179 = vmax.f32 %v161, 0.0
  %v180 = vmax.f32 %v166, 0.0
  %v181 = vmax.f32 %v171, 0.0
  %s182 = smul.u32 0, 64
  %v183 = vlaneseq
  %v184 = vshrl.u32 %v183, 7
  %v185 = vadd.s32 %v184, 8
  %v186 = vadd.s32 %v184, 16
  %v187 = vadd.s32 %v184, 24
  %v188 = vadd.s32 %v184, 32
  %v189 = vadd.s32 %v184, 40
  %v190 = vadd.s32 %v184, 48
  %v191 = vadd.s32 %v184, 56
  %v192 = vstv %s182
  %v193 = vadd.s32 %v192, %v184
  %v194 = vadd.s32 %v192, %v185
  %v195 = vadd.s32 %v192, %v186
  %v196 = vadd.s32 %v192, %v187
  %v197 = vadd.s32 %v192, %v188
  %v198 = vadd.s32 %v192, %v189
  %v199 = vadd.s32 %v192, %v190
  %v200 = vadd.s32 %v192, %v191
  %s201 = sld [smem:[#allocation3]]
  %v202 = vstv %s201
  %vm203 = vcmp.lt.s32.totalorder %v193, %v202
  %vm204 = vcmp.lt.s32.totalorder %v194, %v202
  %vm205 = vcmp.lt.s32.totalorder %v195, %v202
  %vm206 = vcmp.lt.s32.totalorder %v196, %v202
  %vm207 = vcmp.lt.s32.totalorder %v197, %v202
  %vm208 = vcmp.lt.s32.totalorder %v198, %v202
  %vm209 = vcmp.lt.s32.totalorder %v199, %v202
  %vm210 = vcmp.lt.s32.totalorder %v200, %v202
  %v211 = vsel %vm203, 1, 0
  %v212 = vsel %vm204, 1, 0
  %v213 = vsel %vm205, 1, 0
  %v214 = vsel %vm206, 1, 0
  %v215 = vsel %vm207, 1, 0
  %v216 = vsel %vm208, 1, 0
  %v217 = vsel %vm209, 1, 0
  %v218 = vsel %vm210, 1, 0
  %vm219 = vcmp.eq.s32.totalorder %v211, 1
  %vm220 = vcmp.eq.s32.totalorder %v212, 1
  %vm221 = vcmp.eq.s32.totalorder %v213, 1
  %vm222 = vcmp.eq.s32.totalorder %v214, 1
  %vm223 = vcmp.eq.s32.totalorder %v215, 1
  %vm224 = vcmp.eq.s32.totalorder %v216, 1
  %vm225 = vcmp.eq.s32.totalorder %v217, 1
  %vm226 = vcmp.eq.s32.totalorder %v218, 1
  %v227 = vsel %vm219, %v174, 0.0
  %v228 = vsel %vm220, %v175, 0.0
  %v229 = vsel %vm221, %v176, 0.0
  %v230 = vsel %vm222, %v177, 0.0
  %v231 = vsel %vm223, %v178, 0.0
  %v232 = vsel %vm224, %v179, 0.0
  %v233 = vsel %vm225, %v180, 0.0
  %v234 = vsel %vm226, %v181, 0.0
  %v235 = vld [vmem:[%s4] sm:$0x1]
  %vm236 = vcmask 523264
  %v238 = vsel %vm236, 1.0, 0
  %240 = vmatprep.subr.mxu0 0.0
  %241 = vmatpush1.msra.mxu0 %v227
  %242 = vmatprep.subr.mxu0 0.0
  %243 = vmatpush1.msra.mxu0 %v228
  %244 = vmatprep.subr.mxu0 0.0
  %245 = vmatpush1.msra.mxu0 %v229
  %246 = vmatprep.subr.mxu0 0.0
  %247 = vmatpush1.msra.mxu0 %v230
  %248 = vmatprep.subr.mxu0 0.0
  %249 = vmatpush1.msra.mxu0 %v231
  %250 = vmatprep.subr.mxu0 0.0
  %251 = vmatpush1.msra.mxu0 %v232
  %252 = vmatprep.subr.mxu0 0.0
  %253 = vmatpush1.msra.mxu0 %v233
  %254 = vmatprep.subr.mxu0 0.0
  %255 = vmatpush1.msra.mxu0 %v234
  %256 = vmatprep.subr.mxu0 0.0
  %257 = vmatpush1.msra.mxu0 0.0
  %258 = vmatprep.subr.mxu0 0.0
  %259 = vmatpush1.msra.mxu0 0.0
  %260 = vmatprep.subr.mxu0 0.0
  %261 = vmatpush1.msra.mxu0 0.0
  %262 = vmatprep.subr.mxu0 0.0
  %263 = vmatpush1.msra.mxu0 0.0
  %264 = vmatprep.subr.mxu0 0.0
  %265 = vmatpush1.msra.mxu0 0.0
  %266 = vmatprep.subr.mxu0 0.0
  %267 = vmatpush1.msra.mxu0 0.0
  %268 = vmatprep.subr.mxu0 0.0
  %269 = vmatpush1.msra.mxu0 0.0
  %270 = vmatprep.subr.mxu0 0.0
  %271 = vmatpush1.msra.mxu0 0.0
  %272 = vmatprep.subr.mxu0 0.0
  %273 = vmatpush1.msra.mxu0 0.0
  %274 = vmatprep.subr.mxu0 0.0
  %275 = vmatpush1.msra.mxu0 0.0
  %276 = vmatprep.subr.mxu0 0.0
  %277 = vmatpush1.msra.mxu0 0.0
  %278 = vmatprep.subr.mxu0 0.0
  %279 = vmatpush1.msra.mxu0 0.0
  %280 = vmatprep.subr.mxu0 0.0
  %281 = vmatpush1.msra.mxu0 0.0
  %282 = vmatprep.subr.mxu0 0.0
  %283 = vmatpush1.msra.mxu0 0.0
  %284 = vmatprep.subr.mxu0 0.0
  %285 = vmatpush1.msra.mxu0 0.0
  %286 = vmatprep.subr.mxu0 0.0
  %287 = vmatpush1.msra.mxu0 0.0
  %288 = vmatprep.subr.mxu0 0.0
  %289 = vmatpush1.msra.mxu0 0.0
  %290 = vmatprep.subr.mxu0 0.0
  %291 = vmatpush1.msra.mxu0 0.0
  %292 = vmatprep.subr.mxu0 0.0
  %293 = vmatpush1.msra.mxu0 0.0
  %294 = vmatprep.subr.mxu0 0.0
  %295 = vmatpush1.msra.mxu0 0.0
  %296 = vmatprep.subr.mxu0 0.0
  %297 = vmatpush1.msra.mxu0 0.0
  %298 = vmatprep.subr.mxu0 0.0
  %299 = vmatpush1.msra.mxu0 0.0
  %300 = vmatprep.subr.mxu0 0.0
  %301 = vmatpush1.msra.mxu0 0.0
  %302 = vmatprep.subr.mxu0 0.0
  %303 = vmatpush1.msra.mxu0 0.0
  %304 = vmatprep.mubr.f32.mxu0 0.0
  %305 = vmatmul.mubr.f32.gmra.mrb[0].mxu0 %v238
  %v306 = vpop.f32.mrb[0].mxu0
  %v307 = vadd.f32 0.0, %v306
  %v308 = vpop.f32.mrb[0].mxu0
  %309 = vdwg.mxu0
  %v310 = vadd.f32 %v235, %v307
  %vm311 = vcmask 245760
  %312 = vst.msk [vmem:[%s4] sm:$0x1] %vm311, %v310
  %v313 = vld [vmem:[%s5] sm:$0x1]
  %v314 = vmul.f32 %v227, %v227
  %v315 = vmul.f32 %v228, %v228
  %v316 = vmul.f32 %v229, %v229
  %v317 = vmul.f32 %v230, %v230
  %v318 = vmul.f32 %v231, %v231
  %v319 = vmul.f32 %v232, %v232
  %v320 = vmul.f32 %v233, %v233
  %v321 = vmul.f32 %v234, %v234
  %322 = vmatprep.subr.mxu0 0.0
  %323 = vmatpush1.msra.mxu0 %v314
  %324 = vmatprep.subr.mxu0 0.0
  %325 = vmatpush1.msra.mxu0 %v315
  %326 = vmatprep.subr.mxu0 0.0
  %327 = vmatpush1.msra.mxu0 %v316
  %328 = vmatprep.subr.mxu0 0.0
  %329 = vmatpush1.msra.mxu0 %v317
  %330 = vmatprep.subr.mxu0 0.0
  %331 = vmatpush1.msra.mxu0 %v318
  %332 = vmatprep.subr.mxu0 0.0
  %333 = vmatpush1.msra.mxu0 %v319
  %334 = vmatprep.subr.mxu0 0.0
  %335 = vmatpush1.msra.mxu0 %v320
  %336 = vmatprep.subr.mxu0 0.0
  %337 = vmatpush1.msra.mxu0 %v321
  %338 = vmatprep.subr.mxu0 0.0
  %339 = vmatpush1.msra.mxu0 0.0
  %340 = vmatprep.subr.mxu0 0.0
  %341 = vmatpush1.msra.mxu0 0.0
  %342 = vmatprep.subr.mxu0 0.0
  %343 = vmatpush1.msra.mxu0 0.0
  %344 = vmatprep.subr.mxu0 0.0
  %345 = vmatpush1.msra.mxu0 0.0
  %346 = vmatprep.subr.mxu0 0.0
  %347 = vmatpush1.msra.mxu0 0.0
  %348 = vmatprep.subr.mxu0 0.0
  %349 = vmatpush1.msra.mxu0 0.0
  %350 = vmatprep.subr.mxu0 0.0
  %351 = vmatpush1.msra.mxu0 0.0
  %352 = vmatprep.subr.mxu0 0.0
  %353 = vmatpush1.msra.mxu0 0.0
  %354 = vmatprep.subr.mxu0 0.0
  %355 = vmatpush1.msra.mxu0 0.0
  %356 = vmatprep.subr.mxu0 0.0
  %357 = vmatpush1.msra.mxu0 0.0
  %358 = vmatprep.subr.mxu0 0.0
  %359 = vmatpush1.msra.mxu0 0.0
  %360 = vmatprep.subr.mxu0 0.0
  %361 = vmatpush1.msra.mxu0 0.0
  %362 = vmatprep.subr.mxu0 0.0
  %363 = vmatpush1.msra.mxu0 0.0
  %364 = vmatprep.subr.mxu0 0.0
  %365 = vmatpush1.msra.mxu0 0.0
  %366 = vmatprep.subr.mxu0 0.0
  %367 = vmatpush1.msra.mxu0 0.0
  %368 = vmatprep.subr.mxu0 0.0
  %369 = vmatpush1.msra.mxu0 0.0
  %370 = vmatprep.subr.mxu0 0.0
  %371 = vmatpush1.msra.mxu0 0.0
  %372 = vmatprep.subr.mxu0 0.0
  %373 = vmatpush1.msra.mxu0 0.0
  %374 = vmatprep.subr.mxu0 0.0
  %375 = vmatpush1.msra.mxu0 0.0
  %376 = vmatprep.subr.mxu0 0.0
  %377 = vmatpush1.msra.mxu0 0.0
  %378 = vmatprep.subr.mxu0 0.0
  %379 = vmatpush1.msra.mxu0 0.0
  %380 = vmatprep.subr.mxu0 0.0
  %381 = vmatpush1.msra.mxu0 0.0
  %382 = vmatprep.subr.mxu0 0.0
  %383 = vmatpush1.msra.mxu0 0.0
  %384 = vmatprep.subr.mxu0 0.0
  %385 = vmatpush1.msra.mxu0 0.0
  %386 = vmatprep.mubr.f32.mxu0 0.0
  %387 = vmatmul.mubr.f32.gmra.mrb[0].mxu0 %v238
  %v388 = vpop.f32.mrb[0].mxu0
  %v389 = vadd.f32 0.0, %v388
  %v390 = vpop.f32.mrb[0].mxu0
  %391 = vdwg.mxu0
  %v392 = vadd.f32 %v313, %v389
  %393 = vst.msk [vmem:[%s5] sm:$0x1] %vm311, %v392
  // Predicated region
  $region18: #{basenet_forward.5} parent=0 // pred_check
    _
  $region19: #{basenet_forward.5} parent=0 // pred_check_branch
    %395 = sbr.rel (0) target = $region21
  $region20: #{basenet_forward.5} parent=0 // pred_region
    _
  $region21: #{basenet_forward.5} parent=0 // pred_fallthru
    _
  // Predicated region
  $region22: #{basenet_forward.5} parent=0 // pred_check
    _
  $region23: #{basenet_forward.5} parent=0 // pred_check_branch
    %397 = sbr.rel (0) target = $region25
  $region24: #{basenet_forward.5} parent=0 // pred_region
    _
  $region25: #{basenet_forward.5} parent=0 // pred_fallthru
    _
  // Predicated region
  $region26: #{basenet_forward.5} parent=0 // pred_check
    _
  $region27: #{basenet_forward.5} parent=0 // pred_check_branch
    %399 = sbr.rel (0) target = $region29
  $region28: #{basenet_forward.5} parent=0 // pred_region
    _
  $region29: #{basenet_forward.5} parent=0 // pred_fallthru
    _
  // Predicated region
  $region30: #{basenet_forward.5} parent=0 // pred_check
    _
  $region31: #{basenet_forward.5} parent=0 // pred_check_branch
    %401 = sbr.rel (0) target = $region33
  $region32: #{basenet_forward.5} parent=0 // pred_region
    _
  $region33: #{basenet_forward.5} parent=0 // pred_fallthru
    _

// kernel: basenet_forward.6
$region0: #{basenet_forward.6}
  #allocation0 [shape = 'u32[]', space=smem, size = 0x4, offset = 0x4, fixed_abs, tag = 'smem constant byte address 0x4 - core index']
  #allocation1 [shape = 'u32[144,128]{1,0:T(1,128)}', space=vmem, size = 0x12000, scoped, tag = 'internal scratch']
  #allocation2 [shape = 's32[1]{0}', space=sflag, size = 0x4, scoped, tag = 'scoped memory for basenet_forward.6']
  #allocation3 [shape = 's32[1]{0:T(128)S(6)}', space=smem, size = 0x200, scoped, tag = 'prefetched SMEM operand 0']
  %s0 = inlined_call_operand.<no memory space> [shape: s32[1], index: 0, kind: input, shape index: {}]
  %s1 = inlined_call_operand.vmem [shape: f32[64,32], index: 1, kind: input, shape index: {}]
  %s2 = inlined_call_operand.vmem [shape: f32[32,31], index: 2, kind: input, shape index: {}]
  %s3 = inlined_call_operand.vmem [shape: f32[1,31], index: 3, kind: input, shape index: {}]
  %s4 = inlined_call_operand.vmem [shape: f32[31,11], index: 4, kind: input, shape index: {}]
  %s5 = inlined_call_operand.vmem [shape: f32[1,11], index: 5, kind: input, shape index: {}]
  %s6 = inlined_call_operand.vmem [shape: f32[1,11], index: 6, kind: output, shape index: {0}]
  %s7 = inlined_call_operand.vmem [shape: f32[1,11], index: 7, kind: output, shape index: {1}]
  %8 = xla_tuple %s6, %s7
  %s9 = sld [smem:[#allocation0]]
  $region42: #{basenet_forward.6} parent=0
    _
  %s11 = ssub.s32 1, %s9
  %s12 = scalar_select 0, %s11, %s9
  %13 = sst [smem:[#allocation3]] %s0
  // Predicated region
  $region2: #{basenet_forward.6} parent=0 // pred_check
    _
  $region3: #{basenet_forward.6} parent=0 // pred_check_branch
    %15 = sbr.rel (0) target = $region5
  $region4: #{basenet_forward.6} parent=0 // pred_region
    _
  $region5: #{basenet_forward.6} parent=0 // pred_fallthru
    _
  // Predicated region
  $region6: #{basenet_forward.6} parent=0 // pred_check
    _
  $region7: #{basenet_forward.6} parent=0 // pred_check_branch
    %17 = sbr.rel (0) target = $region9
  $region8: #{basenet_forward.6} parent=0 // pred_region
    _
  $region9: #{basenet_forward.6} parent=0 // pred_fallthru
    _
  // Predicated region
  $region10: #{basenet_forward.6} parent=0 // pred_check
    _
  $region11: #{basenet_forward.6} parent=0 // pred_check_branch
    %19 = sbr.rel (0) target = $region13
  $region12: #{basenet_forward.6} parent=0 // pred_region
    _
  $region13: #{basenet_forward.6} parent=0 // pred_fallthru
    _
  // Predicated region
  $region14: #{basenet_forward.6} parent=0 // pred_check
    _
  $region15: #{basenet_forward.6} parent=0 // pred_check_branch
    %21 = sbr.rel (0) target = $region17
  $region16: #{basenet_forward.6} parent=0 // pred_region
    _
  $region17: #{basenet_forward.6} parent=0 // pred_fallthru
    _
  // Predicated region
  $region18: #{basenet_forward.6} parent=0 // pred_check
    _
  $region19: #{basenet_forward.6} parent=0 // pred_check_branch
    %23 = sbr.rel (0) target = $region21
  $region20: #{basenet_forward.6} parent=0 // pred_region
    _
  $region21: #{basenet_forward.6} parent=0 // pred_fallthru
    _
  %p24 = scmp.eq.s32.totalorder 0, 0
  // Predicated region
  $region22: #{basenet_forward.6} parent=0 // pred_check
    %p25 = pneg %p24
  $region23: #{basenet_forward.6} parent=0 // pred_check_branch
    %27 = sbr.rel (%p25) target = $region25
  $region24: #{basenet_forward.6} parent=0 // pred_region
    %vm28 = vcmask 81920
    %29 = vst.msk [vmem:[%s6] sm:$0x1] %vm28, 0.0
    %30 = vst.msk [vmem:[%s7] sm:$0x1] %vm28, 0.0
  $region25: #{basenet_forward.6} parent=0 // pred_fallthru
    _
  %v31 = vld [vmem:[%s1] sm:$0xff]
  %v32 = vld [vmem:[%s1 + $0x8] sm:$0xff]
  %v33 = vld [vmem:[%s1 + $0x10] sm:$0xff]
  %v34 = vld [vmem:[%s1 + $0x18] sm:$0xff]
  %v35 = vld [vmem:[%s1 + $0x20] sm:$0xff]
  %v36 = vld [vmem:[%s1 + $0x28] sm:$0xff]
  %v37 = vld [vmem:[%s1 + $0x30] sm:$0xff]
  %v38 = vld [vmem:[%s1 + $0x38] sm:$0xff]
  %v39 = vld [vmem:[%s2] sm:$0xff]
  %v40 = vld [vmem:[%s2 + $0x8] sm:$0xff]
  %v41 = vld [vmem:[%s2 + $0x10] sm:$0xff]
  %v42 = vld [vmem:[%s2 + $0x18] sm:$0xff]
  %v43 = vld [vmem:[%s3] sm:$0x1]
  %v45 = vlaneseq
  %v46 = vshrl.u32 %v45, 7
  %v47 = vsub.s32 0, %v46
  %v48 = vrot.slane %v43, %v47
  %vm50 = vcmask 261120
  %v52 = vsel %vm50, %v31, 0
  %v55 = vsel %vm50, %v32, 0
  %v58 = vsel %vm50, %v33, 0
  %v61 = vsel %vm50, %v34, 0
  %v64 = vsel %vm50, %v35, 0
  %v67 = vsel %vm50, %v36, 0
  %v70 = vsel %vm50, %v37, 0
  %v73 = vsel %vm50, %v38, 0
  %75 = vmatprep.subr.mxu0 0.0
  %76 = vmatpush1.msra.mxu0 %v39
  %77 = vmatprep.subr.mxu0 0.0
  %78 = vmatpush1.msra.mxu0 %v40
  %79 = vmatprep.subr.mxu0 0.0
  %80 = vmatpush1.msra.mxu0 %v41
  %81 = vmatprep.subr.mxu0 0.0
  %82 = vmatpush1.msra.mxu0 %v42
  %83 = vmatprep.subr.mxu0 0.0
  %84 = vmatpush1.msra.mxu0 0.0
  %85 = vmatprep.subr.mxu0 0.0
  %86 = vmatpush1.msra.mxu0 0.0
  %87 = vmatprep.subr.mxu0 0.0
  %88 = vmatpush1.msra.mxu0 0.0
  %89 = vmatprep.subr.mxu0 0.0
  %90 = vmatpush1.msra.mxu0 0.0
  %91 = vmatprep.subr.mxu0 0.0
  %92 = vmatpush1.msra.mxu0 0.0
  %93 = vmatprep.subr.mxu0 0.0
  %94 = vmatpush1.msra.mxu0 0.0
  %95 = vmatprep.subr.mxu0 0.0
  %96 = vmatpush1.msra.mxu0 0.0
  %97 = vmatprep.subr.mxu0 0.0
  %98 = vmatpush1.msra.mxu0 0.0
  %99 = vmatprep.subr.mxu0 0.0
  %100 = vmatpush1.msra.mxu0 0.0
  %101 = vmatprep.subr.mxu0 0.0
  %102 = vmatpush1.msra.mxu0 0.0
  %103 = vmatprep.subr.mxu0 0.0
  %104 = vmatpush1.msra.mxu0 0.0
  %105 = vmatprep.subr.mxu0 0.0
  %106 = vmatpush1.msra.mxu0 0.0
  %107 = vmatprep.subr.mxu0 0.0
  %108 = vmatpush1.msra.mxu0 0.0
  %109 = vmatprep.subr.mxu0 0.0
  %110 = vmatpush1.msra.mxu0 0.0
  %111 = vmatprep.subr.mxu0 0.0
  %112 = vmatpush1.msra.mxu0 0.0
  %113 = vmatprep.subr.mxu0 0.0
  %114 = vmatpush1.msra.mxu0 0.0
  %115 = vmatprep.subr.mxu0 0.0
  %116 = vmatpush1.msra.mxu0 0.0
  %117 = vmatprep.subr.mxu0 0.0
  %118 = vmatpush1.msra.mxu0 0.0
  %119 = vmatprep.subr.mxu0 0.0
  %120 = vmatpush1.msra.mxu0 0.0
  %121 = vmatprep.subr.mxu0 0.0
  %122 = vmatpush1.msra.mxu0 0.0
  %123 = vmatprep.subr.mxu0 0.0
  %124 = vmatpush1.msra.mxu0 0.0
  %125 = vmatprep.subr.mxu0 0.0
  %126 = vmatpush1.msra.mxu0 0.0
  %127 = vmatprep.subr.mxu0 0.0
  %128 = vmatpush1.msra.mxu0 0.0
  %129 = vmatprep.subr.mxu0 0.0
  %130 = vmatpush1.msra.mxu0 0.0
  %131 = vmatprep.subr.mxu0 0.0
  %132 = vmatpush1.msra.mxu0 0.0
  %133 = vmatprep.subr.mxu0 0.0
  %134 = vmatpush1.msra.mxu0 0.0
  %135 = vmatprep.subr.mxu0 0.0
  %136 = vmatpush1.msra.mxu0 0.0
  %137 = vmatprep.subr.mxu0 0.0
  %138 = vmatpush1.msra.mxu0 0.0
  %139 = vmatprep.mubr.f32.mxu0 0.0
  %140 = vmatmul.mubr.f32.gmra.mrb[0].mxu0 %v52
  %v141 = vpop.f32.mrb[0].mxu0
  %v142 = vadd.f32 %v48, %v141
  %v143 = vpop.f32.mrb[0].mxu0
  %144 = vmatprep.mubr.f32.mxu0 0.0
  %145 = vmatmul.mubr.f32.gmra.mrb[0].mxu0 %v55
  %v146 = vpop.f32.mrb[0].mxu0
  %v147 = vadd.f32 %v48, %v146
  %v148 = vpop.f32.mrb[0].mxu0
  %149 = vmatprep.mubr.f32.mxu0 0.0
  %150 = vmatmul.mubr.f32.gmra.mrb[0].mxu0 %v58
  %v151 = vpop.f32.mrb[0].mxu0
  %v152 = vadd.f32 %v48, %v151
  %v153 = vpop.f32.mrb[0].mxu0
  %154 = vmatprep.mubr.f32.mxu0 0.0
  %155 = vmatmul.mubr.f32.gmra.mrb[0].mxu0 %v61
  %v156 = vpop.f32.mrb[0].mxu0
  %v157 = vadd.f32 %v48, %v156
  %v158 = vpop.f32.mrb[0].mxu0
  %159 = vmatprep.mubr.f32.mxu0 0.0
  %160 = vmatmul.mubr.f32.gmra.mrb[0].mxu0 %v64
  %v161 = vpop.f32.mrb[0].mxu0
  %v162 = vadd.f32 %v48, %v161
  %v163 = vpop.f32.mrb[0].mxu0
  %164 = vmatprep.mubr.f32.mxu0 0.0
  %165 = vmatmul.mubr.f32.gmra.mrb[0].mxu0 %v67
  %v166 = vpop.f32.mrb[0].mxu0
  %v167 = vadd.f32 %v48, %v166
  %v168 = vpop.f32.mrb[0].mxu0
  %169 = vmatprep.mubr.f32.mxu0 0.0
  %170 = vmatmul.mubr.f32.gmra.mrb[0].mxu0 %v70
  %v171 = vpop.f32.mrb[0].mxu0
  %v172 = vadd.f32 %v48, %v171
  %v173 = vpop.f32.mrb[0].mxu0
  %174 = vmatprep.mubr.f32.mxu0 0.0
  %175 = vmatmul.mubr.f32.gmra.mrb[0].mxu0 %v73
  %v176 = vpop.f32.mrb[0].mxu0
  %v177 = vadd.f32 %v48, %v176
  %v178 = vpop.f32.mrb[0].mxu0
  %179 = vdwg.mxu0
  %v180 = vmax.f32 %v142, 0.0
  %v181 = vmax.f32 %v147, 0.0
  %v182 = vmax.f32 %v152, 0.0
  %v183 = vmax.f32 %v157, 0.0
  %v184 = vmax.f32 %v162, 0.0
  %v185 = vmax.f32 %v167, 0.0
  %v186 = vmax.f32 %v172, 0.0
  %v187 = vmax.f32 %v177, 0.0
  %v188 = vld [vmem:[%s4] sm:$0xff]
  %v189 = vld [vmem:[%s4 + $0x8] sm:$0xff]
  %v190 = vld [vmem:[%s4 + $0x10] sm:$0xff]
  %v191 = vld [vmem:[%s4 + $0x18] sm:$0x7f]
  %v192 = vld [vmem:[%s5] sm:$0x1]
  %v194 = vlaneseq
  %v195 = vshrl.u32 %v194, 7
  %v196 = vsub.s32 0, %v195
  %v197 = vrot.slane %v192, %v196
  %vm199 = vcmask 252928
  %v201 = vsel %vm199, %v180, 0
  %v204 = vsel %vm199, %v181, 0
  %v207 = vsel %vm199, %v182, 0
  %v210 = vsel %vm199, %v183, 0
  %v213 = vsel %vm199, %v184, 0
  %v216 = vsel %vm199, %v185, 0
  %v219 = vsel %vm199, %v186, 0
  %v222 = vsel %vm199, %v187, 0
  %vm224 = vcmask 1046528
  %v226 = vsel %vm224, %v191, 0
  %228 = vmatprep.subr.mxu0 0.0
  %229 = vmatpush1.msra.mxu0 %v188
  %230 = vmatprep.subr.mxu0 0.0
  %231 = vmatpush1.msra.mxu0 %v189
  %232 = vmatprep.subr.mxu0 0.0
  %233 = vmatpush1.msra.mxu0 %v190
  %234 = vmatprep.subr.mxu0 0.0
  %235 = vmatpush1.msra.mxu0 %v226
  %236 = vmatprep.subr.mxu0 0.0
  %237 = vmatpush1.msra.mxu0 0.0
  %238 = vmatprep.subr.mxu0 0.0
  %239 = vmatpush1.msra.mxu0 0.0
  %240 = vmatprep.subr.mxu0 0.0
  %241 = vmatpush1.msra.mxu0 0.0
  %242 = vmatprep.subr.mxu0 0.0
  %243 = vmatpush1.msra.mxu0 0.0
  %244 = vmatprep.subr.mxu0 0.0
  %245 = vmatpush1.msra.mxu0 0.0
  %246 = vmatprep.subr.mxu0 0.0
  %247 = vmatpush1.msra.mxu0 0.0
  %248 = vmatprep.subr.mxu0 0.0
  %249 = vmatpush1.msra.mxu0 0.0
  %250 = vmatprep.subr.mxu0 0.0
  %251 = vmatpush1.msra.mxu0 0.0
  %252 = vmatprep.subr.mxu0 0.0
  %253 = vmatpush1.msra.mxu0 0.0
  %254 = vmatprep.subr.mxu0 0.0
  %255 = vmatpush1.msra.mxu0 0.0
  %256 = vmatprep.subr.mxu0 0.0
  %257 = vmatpush1.msra.mxu0 0.0
  %258 = vmatprep.subr.mxu0 0.0
  %259 = vmatpush1.msra.mxu0 0.0
  %260 = vmatprep.subr.mxu0 0.0
  %261 = vmatpush1.msra.mxu0 0.0
  %262 = vmatprep.subr.mxu0 0.0
  %263 = vmatpush1.msra.mxu0 0.0
  %264 = vmatprep.subr.mxu0 0.0
  %265 = vmatpush1.msra.mxu0 0.0
  %266 = vmatprep.subr.mxu0 0.0
  %267 = vmatpush1.msra.mxu0 0.0
  %268 = vmatprep.subr.mxu0 0.0
  %269 = vmatpush1.msra.mxu0 0.0
  %270 = vmatprep.subr.mxu0 0.0
  %271 = vmatpush1.msra.mxu0 0.0
  %272 = vmatprep.subr.mxu0 0.0
  %273 = vmatpush1.msra.mxu0 0.0
  %274 = vmatprep.subr.mxu0 0.0
  %275 = vmatpush1.msra.mxu0 0.0
  %276 = vmatprep.subr.mxu0 0.0
  %277 = vmatpush1.msra.mxu0 0.0
  %278 = vmatprep.subr.mxu0 0.0
  %279 = vmatpush1.msra.mxu0 0.0
  %280 = vmatprep.subr.mxu0 0.0
  %281 = vmatpush1.msra.mxu0 0.0
  %282 = vmatprep.subr.mxu0 0.0
  %283 = vmatpush1.msra.mxu0 0.0
  %284 = vmatprep.subr.mxu0 0.0
  %285 = vmatpush1.msra.mxu0 0.0
  %286 = vmatprep.subr.mxu0 0.0
  %287 = vmatpush1.msra.mxu0 0.0
  %288 = vmatprep.subr.mxu0 0.0
  %289 = vmatpush1.msra.mxu0 0.0
  %290 = vmatprep.subr.mxu0 0.0
  %291 = vmatpush1.msra.mxu0 0.0
  %292 = vmatprep.mubr.f32.mxu0 0.0
  %293 = vmatmul.mubr.f32.gmra.mrb[0].mxu0 %v201
  %v294 = vpop.f32.mrb[0].mxu0
  %v295 = vadd.f32 %v197, %v294
  %v296 = vpop.f32.mrb[0].mxu0
  %297 = vmatprep.mubr.f32.mxu0 0.0
  %298 = vmatmul.mubr.f32.gmra.mrb[0].mxu0 %v204
  %v299 = vpop.f32.mrb[0].mxu0
  %v300 = vadd.f32 %v197, %v299
  %v301 = vpop.f32.mrb[0].mxu0
  %302 = vmatprep.mubr.f32.mxu0 0.0
  %303 = vmatmul.mubr.f32.gmra.mrb[0].mxu0 %v207
  %v304 = vpop.f32.mrb[0].mxu0
  %v305 = vadd.f32 %v197, %v304
  %v306 = vpop.f32.mrb[0].mxu0
  %307 = vmatprep.mubr.f32.mxu0 0.0
  %308 = vmatmul.mubr.f32.gmra.mrb[0].mxu0 %v210
  %v309 = vpop.f32.mrb[0].mxu0
  %v310 = vadd.f32 %v197, %v309
  %v311 = vpop.f32.mrb[0].mxu0
  %312 = vmatprep.mubr.f32.mxu0 0.0
  %313 = vmatmul.mubr.f32.gmra.mrb[0].mxu0 %v213
  %v314 = vpop.f32.mrb[0].mxu0
  %v315 = vadd.f32 %v197, %v314
  %v316 = vpop.f32.mrb[0].mxu0
  %317 = vmatprep.mubr.f32.mxu0 0.0
  %318 = vmatmul.mubr.f32.gmra.mrb[0].mxu0 %v216
  %v319 = vpop.f32.mrb[0].mxu0
  %v320 = vadd.f32 %v197, %v319
  %v321 = vpop.f32.mrb[0].mxu0
  %322 = vmatprep.mubr.f32.mxu0 0.0
  %323 = vmatmul.mubr.f32.gmra.mrb[0].mxu0 %v219
  %v324 = vpop.f32.mrb[0].mxu0
  %v325 = vadd.f32 %v197, %v324
  %v326 = vpop.f32.mrb[0].mxu0
  %327 = vmatprep.mubr.f32.mxu0 0.0
  %328 = vmatmul.mubr.f32.gmra.mrb[0].mxu0 %v222
  %v329 = vpop.f32.mrb[0].mxu0
  %v330 = vadd.f32 %v197, %v329
  %v331 = vpop.f32.mrb[0].mxu0
  %332 = vdwg.mxu0
  %v333 = vmax.f32 %v295, 0.0
  %v334 = vmax.f32 %v300, 0.0
  %v335 = vmax.f32 %v305, 0.0
  %v336 = vmax.f32 %v310, 0.0
  %v337 = vmax.f32 %v315, 0.0
  %v338 = vmax.f32 %v320, 0.0
  %v339 = vmax.f32 %v325, 0.0
  %v340 = vmax.f32 %v330, 0.0
  %s341 = smul.u32 0, 64
  %v342 = vlaneseq
  %v343 = vshrl.u32 %v342, 7
  %v344 = vadd.s32 %v343, 8
  %v345 = vadd.s32 %v343, 16
  %v346 = vadd.s32 %v343, 24
  %v347 = vadd.s32 %v343, 32
  %v348 = vadd.s32 %v343, 40
  %v349 = vadd.s32 %v343, 48
  %v350 = vadd.s32 %v343, 56
  %v351 = vstv %s341
  %v352 = vadd.s32 %v351, %v343
  %v353 = vadd.s32 %v351, %v344
  %v354 = vadd.s32 %v351, %v345
  %v355 = vadd.s32 %v351, %v346
  %v356 = vadd.s32 %v351, %v347
  %v357 = vadd.s32 %v351, %v348
  %v358 = vadd.s32 %v351, %v349
  %v359 = vadd.s32 %v351, %v350
  %s360 = sld [smem:[#allocation3]]
  %v361 = vstv %s360
  %vm362 = vcmp.lt.s32.totalorder %v352, %v361
  %vm363 = vcmp.lt.s32.totalorder %v353, %v361
  %vm364 = vcmp.lt.s32.totalorder %v354, %v361
  %vm365 = vcmp.lt.s32.totalorder %v355, %v361
  %vm366 = vcmp.lt.s32.totalorder %v356, %v361
  %vm367 = vcmp.lt.s32.totalorder %v357, %v361
  %vm368 = vcmp.lt.s32.totalorder %v358, %v361
  %vm369 = vcmp.lt.s32.totalorder %v359, %v361
  %v370 = vsel %vm362, 1, 0
  %v371 = vsel %vm363, 1, 0
  %v372 = vsel %vm364, 1, 0
  %v373 = vsel %vm365, 1, 0
  %v374 = vsel %vm366, 1, 0
  %v375 = vsel %vm367, 1, 0
  %v376 = vsel %vm368, 1, 0
  %v377 = vsel %vm369, 1, 0
  %vm378 = vcmp.eq.s32.totalorder %v370, 1
  %vm379 = vcmp.eq.s32.totalorder %v371, 1
  %vm380 = vcmp.eq.s32.totalorder %v372, 1
  %vm381 = vcmp.eq.s32.totalorder %v373, 1
  %vm382 = vcmp.eq.s32.totalorder %v374, 1
  %vm383 = vcmp.eq.s32.totalorder %v375, 1
  %vm384 = vcmp.eq.s32.totalorder %v376, 1
  %vm385 = vcmp.eq.s32.totalorder %v377, 1
  %v386 = vsel %vm378, %v333, 0.0
  %v387 = vsel %vm379, %v334, 0.0
  %v388 = vsel %vm380, %v335, 0.0
  %v389 = vsel %vm381, %v336, 0.0
  %v390 = vsel %vm382, %v337, 0.0
  %v391 = vsel %vm383, %v338, 0.0
  %v392 = vsel %vm384, %v339, 0.0
  %v393 = vsel %vm385, %v340, 0.0
  %v394 = vld [vmem:[%s6] sm:$0x1]
  %vm395 = vcmask 523264
  %v397 = vsel %vm395, 1.0, 0
  %399 = vmatprep.subr.mxu0 0.0
  %400 = vmatpush1.msra.mxu0 %v386
  %401 = vmatprep.subr.mxu0 0.0
  %402 = vmatpush1.msra.mxu0 %v387
  %403 = vmatprep.subr.mxu0 0.0
  %404 = vmatpush1.msra.mxu0 %v388
  %405 = vmatprep.subr.mxu0 0.0
  %406 = vmatpush1.msra.mxu0 %v389
  %407 = vmatprep.subr.mxu0 0.0
  %408 = vmatpush1.msra.mxu0 %v390
  %409 = vmatprep.subr.mxu0 0.0
  %410 = vmatpush1.msra.mxu0 %v391
  %411 = vmatprep.subr.mxu0 0.0
  %412 = vmatpush1.msra.mxu0 %v392
  %413 = vmatprep.subr.mxu0 0.0
  %414 = vmatpush1.msra.mxu0 %v393
  %415 = vmatprep.subr.mxu0 0.0
  %416 = vmatpush1.msra.mxu0 0.0
  %417 = vmatprep.subr.mxu0 0.0
  %418 = vmatpush1.msra.mxu0 0.0
  %419 = vmatprep.subr.mxu0 0.0
  %420 = vmatpush1.msra.mxu0 0.0
  %421 = vmatprep.subr.mxu0 0.0
  %422 = vmatpush1.msra.mxu0 0.0
  %423 = vmatprep.subr.mxu0 0.0
  %424 = vmatpush1.msra.mxu0 0.0
  %425 = vmatprep.subr.mxu0 0.0
  %426 = vmatpush1.msra.mxu0 0.0
  %427 = vmatprep.subr.mxu0 0.0
  %428 = vmatpush1.msra.mxu0 0.0
  %429 = vmatprep.subr.mxu0 0.0
  %430 = vmatpush1.msra.mxu0 0.0
  %431 = vmatprep.subr.mxu0 0.0
  %432 = vmatpush1.msra.mxu0 0.0
  %433 = vmatprep.subr.mxu0 0.0
  %434 = vmatpush1.msra.mxu0 0.0
  %435 = vmatprep.subr.mxu0 0.0
  %436 = vmatpush1.msra.mxu0 0.0
  %437 = vmatprep.subr.mxu0 0.0
  %438 = vmatpush1.msra.mxu0 0.0
  %439 = vmatprep.subr.mxu0 0.0
  %440 = vmatpush1.msra.mxu0 0.0
  %441 = vmatprep.subr.mxu0 0.0
  %442 = vmatpush1.msra.mxu0 0.0
  %443 = vmatprep.subr.mxu0 0.0
  %444 = vmatpush1.msra.mxu0 0.0
  %445 = vmatprep.subr.mxu0 0.0
  %446 = vmatpush1.msra.mxu0 0.0
  %447 = vmatprep.subr.mxu0 0.0
  %448 = vmatpush1.msra.mxu0 0.0
  %449 = vmatprep.subr.mxu0 0.0
  %450 = vmatpush1.msra.mxu0 0.0
  %451 = vmatprep.subr.mxu0 0.0
  %452 = vmatpush1.msra.mxu0 0.0
  %453 = vmatprep.subr.mxu0 0.0
  %454 = vmatpush1.msra.mxu0 0.0
  %455 = vmatprep.subr.mxu0 0.0
  %456 = vmatpush1.msra.mxu0 0.0
  %457 = vmatprep.subr.mxu0 0.0
  %458 = vmatpush1.msra.mxu0 0.0
  %459 = vmatprep.subr.mxu0 0.0
  %460 = vmatpush1.msra.mxu0 0.0
  %461 = vmatprep.subr.mxu0 0.0
  %462 = vmatpush1.msra.mxu0 0.0
  %463 = vmatprep.mubr.f32.mxu0 0.0
  %464 = vmatmul.mubr.f32.gmra.mrb[0].mxu0 %v397
  %v465 = vpop.f32.mrb[0].mxu0
  %v466 = vadd.f32 0.0, %v465
  %v467 = vpop.f32.mrb[0].mxu0
  %468 = vdwg.mxu0
  %v469 = vadd.f32 %v394, %v466
  %vm470 = vcmask 81920
  %471 = vst.msk [vmem:[%s6] sm:$0x1] %vm470, %v469
  %v472 = vld [vmem:[%s7] sm:$0x1]
  %v473 = vmul.f32 %v386, %v386
  %v474 = vmul.f32 %v387, %v387
  %v475 = vmul.f32 %v388, %v388
  %v476 = vmul.f32 %v389, %v389
  %v477 = vmul.f32 %v390, %v390
  %v478 = vmul.f32 %v391, %v391
  %v479 = vmul.f32 %v392, %v392
  %v480 = vmul.f32 %v393, %v393
  %481 = vmatprep.subr.mxu0 0.0
  %482 = vmatpush1.msra.mxu0 %v473
  %483 = vmatprep.subr.mxu0 0.0
  %484 = vmatpush1.msra.mxu0 %v474
  %485 = vmatprep.subr.mxu0 0.0
  %486 = vmatpush1.msra.mxu0 %v475
  %487 = vmatprep.subr.mxu0 0.0
  %488 = vmatpush1.msra.mxu0 %v476
  %489 = vmatprep.subr.mxu0 0.0
  %490 = vmatpush1.msra.mxu0 %v477
  %491 = vmatprep.subr.mxu0 0.0
  %492 = vmatpush1.msra.mxu0 %v478
  %493 = vmatprep.subr.mxu0 0.0
  %494 = vmatpush1.msra.mxu0 %v479
  %495 = vmatprep.subr.mxu0 0.0
  %496 = vmatpush1.msra.mxu0 %v480
  %497 = vmatprep.subr.mxu0 0.0
  %498 = vmatpush1.msra.mxu0 0.0
  %499 = vmatprep.subr.mxu0 0.0
  %500 = vmatpush1.msra.mxu0 0.0
  %501 = vmatprep.subr.mxu0 0.0
  %502 = vmatpush1.msra.mxu0 0.0
  %503 = vmatprep.subr.mxu0 0.0
  %504 = vmatpush1.msra.mxu0 0.0
  %505 = vmatprep.subr.mxu0 0.0
  %506 = vmatpush1.msra.mxu0 0.0
  %507 = vmatprep.subr.mxu0 0.0
  %508 = vmatpush1.msra.mxu0 0.0
  %509 = vmatprep.subr.mxu0 0.0
  %510 = vmatpush1.msra.mxu0 0.0
  %511 = vmatprep.subr.mxu0 0.0
  %512 = vmatpush1.msra.mxu0 0.0
  %513 = vmatprep.subr.mxu0 0.0
  %514 = vmatpush1.msra.mxu0 0.0
  %515 = vmatprep.subr.mxu0 0.0
  %516 = vmatpush1.msra.mxu0 0.0
  %517 = vmatprep.subr.mxu0 0.0
  %518 = vmatpush1.msra.mxu0 0.0
  %519 = vmatprep.subr.mxu0 0.0
  %520 = vmatpush1.msra.mxu0 0.0
  %521 = vmatprep.subr.mxu0 0.0
  %522 = vmatpush1.msra.mxu0 0.0
  %523 = vmatprep.subr.mxu0 0.0
  %524 = vmatpush1.msra.mxu0 0.0
  %525 = vmatprep.subr.mxu0 0.0
  %526 = vmatpush1.msra.mxu0 0.0
  %527 = vmatprep.subr.mxu0 0.0
  %528 = vmatpush1.msra.mxu0 0.0
  %529 = vmatprep.subr.mxu0 0.0
  %530 = vmatpush1.msra.mxu0 0.0
  %531 = vmatprep.subr.mxu0 0.0
  %532 = vmatpush1.msra.mxu0 0.0
  %533 = vmatprep.subr.mxu0 0.0
  %534 = vmatpush1.msra.mxu0 0.0
  %535 = vmatprep.subr.mxu0 0.0
  %536 = vmatpush1.msra.mxu0 0.0
  %537 = vmatprep.subr.mxu0 0.0
  %538 = vmatpush1.msra.mxu0 0.0
  %539 = vmatprep.subr.mxu0 0.0
  %540 = vmatpush1.msra.mxu0 0.0
  %541 = vmatprep.subr.mxu0 0.0
  %542 = vmatpush1.msra.mxu0 0.0
  %543 = vmatprep.subr.mxu0 0.0
  %544 = vmatpush1.msra.mxu0 0.0
  %545 = vmatprep.mubr.f32.mxu0 0.0
  %546 = vmatmul.mubr.f32.gmra.mrb[0].mxu0 %v397
  %v547 = vpop.f32.mrb[0].mxu0
  %v548 = vadd.f32 0.0, %v547
  %v549 = vpop.f32.mrb[0].mxu0
  %550 = vdwg.mxu0
  %v551 = vadd.f32 %v472, %v548
  %552 = vst.msk [vmem:[%s7] sm:$0x1] %vm470, %v551
  // Predicated region
  $region26: #{basenet_forward.6} parent=0 // pred_check
    _
  $region27: #{basenet_forward.6} parent=0 // pred_check_branch
    %554 = sbr.rel (0) target = $region29
  $region28: #{basenet_forward.6} parent=0 // pred_region
    _
  $region29: #{basenet_forward.6} parent=0 // pred_fallthru
    _
  // Predicated region
  $region30: #{basenet_forward.6} parent=0 // pred_check
    _
  $region31: #{basenet_forward.6} parent=0 // pred_check_branch
    %556 = sbr.rel (0) target = $region33
  $region32: #{basenet_forward.6} parent=0 // pred_region
    _
  $region33: #{basenet_forward.6} parent=0 // pred_fallthru
    _
  // Predicated region
  $region34: #{basenet_forward.6} parent=0 // pred_check
    _
  $region35: #{basenet_forward.6} parent=0 // pred_check_branch
    %558 = sbr.rel (0) target = $region37
  $region36: #{basenet_forward.6} parent=0 // pred_region
    _
  $region37: #{basenet_forward.6} parent=0 // pred_fallthru
    _
  // Predicated region
  $region38: #{basenet_forward.6} parent=0 // pred_check
    _
  $region39: #{basenet_forward.6} parent=0 // pred_check_branch
    %560 = sbr.rel (0) target = $region41
  $region40: #{basenet_forward.6} parent=0 // pred_region
    _
  $region41: #{basenet_forward.6} parent=0 // pred_fallthru
    _

// kernel: basenet_forward.7
$region0: #{basenet_forward.7}
  #allocation0 [shape = 'u32[]', space=smem, size = 0x4, offset = 0x4, fixed_abs, tag = 'smem constant byte address 0x4 - core index']
  #allocation1 [shape = 'u32[144,128]{1,0:T(1,128)}', space=vmem, size = 0x12000, scoped, tag = 'internal scratch']
  #allocation2 [shape = 'f32[1,1]{1,0:T(1,128)S(1)}', space=vmem, size = 0x200, scoped, tag = 'scoped memory for basenet_forward.7']
  %s0 = inlined_call_operand.vmem [shape: f32[64,32], index: 0, kind: input, shape index: {}]
  %s1 = inlined_call_operand.vmem [shape: f32[32,31], index: 1, kind: input, shape index: {}]
  %s2 = inlined_call_operand.vmem [shape: f32[1,31], index: 2, kind: input, shape index: {}]
  %s3 = inlined_call_operand.vmem [shape: f32[31,11], index: 3, kind: input, shape index: {}]
  %s4 = inlined_call_operand.vmem [shape: f32[1,11], index: 4, kind: input, shape index: {}]
  %s5 = inlined_call_operand.vmem [shape: f32[11,3], index: 5, kind: input, shape index: {}]
  %s6 = inlined_call_operand.vmem [shape: f32[1,3], index: 6, kind: input, shape index: {}]
  %s7 = inlined_call_operand.vmem [shape: f32[1,3], index: 7, kind: input, shape index: {}]
  %s8 = inlined_call_operand.<no memory space> [shape: f32[1,1], index: 8, kind: input, shape index: {}]
  %s9 = inlined_call_operand.vmem [shape: f32[1,64], index: 9, kind: output, shape index: {}]
  %s10 = sld [smem:[#allocation0]]
  $region46: #{basenet_forward.7} parent=0
    _
  %s12 = ssub.s32 1, %s10
  %s13 = scalar_select 0, %s12, %s10
  %v14 = vstv %s8
  %15 = vst [vmem:[#allocation2] sm:$0x1] %v14
  // Predicated region
  $region2: #{basenet_forward.7} parent=0 // pred_check
    _
  $region3: #{basenet_forward.7} parent=0 // pred_check_branch
    %17 = sbr.rel (0) target = $region5
  $region4: #{basenet_forward.7} parent=0 // pred_region
    _
  $region5: #{basenet_forward.7} parent=0 // pred_fallthru
    _
  // Predicated region
  $region6: #{basenet_forward.7} parent=0 // pred_check
    _
  $region7: #{basenet_forward.7} parent=0 // pred_check_branch
    %19 = sbr.rel (0) target = $region9
  $region8: #{basenet_forward.7} parent=0 // pred_region
    _
  $region9: #{basenet_forward.7} parent=0 // pred_fallthru
    _
  // Predicated region
  $region10: #{basenet_forward.7} parent=0 // pred_check
    _
  $region11: #{basenet_forward.7} parent=0 // pred_check_branch
    %21 = sbr.rel (0) target = $region13
  $region12: #{basenet_forward.7} parent=0 // pred_region
    _
  $region13: #{basenet_forward.7} parent=0 // pred_fallthru
    _
  // Predicated region
  $region14: #{basenet_forward.7} parent=0 // pred_check
    _
  $region15: #{basenet_forward.7} parent=0 // pred_check_branch
    %23 = sbr.rel (0) target = $region17
  $region16: #{basenet_forward.7} parent=0 // pred_region
    _
  $region17: #{basenet_forward.7} parent=0 // pred_fallthru
    _
  // Predicated region
  $region18: #{basenet_forward.7} parent=0 // pred_check
    _
  $region19: #{basenet_forward.7} parent=0 // pred_check_branch
    %25 = sbr.rel (0) target = $region21
  $region20: #{basenet_forward.7} parent=0 // pred_region
    _
  $region21: #{basenet_forward.7} parent=0 // pred_fallthru
    _
  // Predicated region
  $region22: #{basenet_forward.7} parent=0 // pred_check
    _
  $region23: #{basenet_forward.7} parent=0 // pred_check_branch
    %27 = sbr.rel (0) target = $region25
  $region24: #{basenet_forward.7} parent=0 // pred_region
    _
  $region25: #{basenet_forward.7} parent=0 // pred_fallthru
    _
  // Predicated region
  $region26: #{basenet_forward.7} parent=0 // pred_check
    _
  $region27: #{basenet_forward.7} parent=0 // pred_check_branch
    %29 = sbr.rel (0) target = $region29
  $region28: #{basenet_forward.7} parent=0 // pred_region
    _
  $region29: #{basenet_forward.7} parent=0 // pred_fallthru
    _
  // Predicated region
  $region30: #{basenet_forward.7} parent=0 // pred_check
    _
  $region31: #{basenet_forward.7} parent=0 // pred_check_branch
    %31 = sbr.rel (0) target = $region33
  $region32: #{basenet_forward.7} parent=0 // pred_region
    _
  $region33: #{basenet_forward.7} parent=0 // pred_fallthru
    _
  // Predicated region
  $region34: #{basenet_forward.7} parent=0 // pred_check
    _
  $region35: #{basenet_forward.7} parent=0 // pred_check_branch
    %33 = sbr.rel (0) target = $region37
  $region36: #{basenet_forward.7} parent=0 // pred_region
    _
  $region37: #{basenet_forward.7} parent=0 // pred_fallthru
    _
  %v34 = vld [vmem:[%s0] sm:$0xff]
  %v35 = vld [vmem:[%s0 + $0x8] sm:$0xff]
  %v36 = vld [vmem:[%s0 + $0x10] sm:$0xff]
  %v37 = vld [vmem:[%s0 + $0x18] sm:$0xff]
  %v38 = vld [vmem:[%s0 + $0x20] sm:$0xff]
  %v39 = vld [vmem:[%s0 + $0x28] sm:$0xff]
  %v40 = vld [vmem:[%s0 + $0x30] sm:$0xff]
  %v41 = vld [vmem:[%s0 + $0x38] sm:$0xff]
  %v42 = vld [vmem:[%s1] sm:$0xff]
  %v43 = vld [vmem:[%s1 + $0x8] sm:$0xff]
  %v44 = vld [vmem:[%s1 + $0x10] sm:$0xff]
  %v45 = vld [vmem:[%s1 + $0x18] sm:$0xff]
  %v46 = vld [vmem:[%s2] sm:$0x1]
  %v48 = vlaneseq
  %v49 = vshrl.u32 %v48, 7
  %v50 = vsub.s32 0, %v49
  %v51 = vrot.slane %v46, %v50
  %vm53 = vcmask 261120
  %v55 = vsel %vm53, %v34, 0
  %v58 = vsel %vm53, %v35, 0
  %v61 = vsel %vm53, %v36, 0
  %v64 = vsel %vm53, %v37, 0
  %v67 = vsel %vm53, %v38, 0
  %v70 = vsel %vm53, %v39, 0
  %v73 = vsel %vm53, %v40, 0
  %v76 = vsel %vm53, %v41, 0
  %78 = vmatprep.subr.mxu0 0.0
  %79 = vmatpush1.msra.mxu0 %v42
  %80 = vmatprep.subr.mxu0 0.0
  %81 = vmatpush1.msra.mxu0 %v43
  %82 = vmatprep.subr.mxu0 0.0
  %83 = vmatpush1.msra.mxu0 %v44
  %84 = vmatprep.subr.mxu0 0.0
  %85 = vmatpush1.msra.mxu0 %v45
  %86 = vmatprep.subr.mxu0 0.0
  %87 = vmatpush1.msra.mxu0 0.0
  %88 = vmatprep.subr.mxu0 0.0
  %89 = vmatpush1.msra.mxu0 0.0
  %90 = vmatprep.subr.mxu0 0.0
  %91 = vmatpush1.msra.mxu0 0.0
  %92 = vmatprep.subr.mxu0 0.0
  %93 = vmatpush1.msra.mxu0 0.0
  %94 = vmatprep.subr.mxu0 0.0
  %95 = vmatpush1.msra.mxu0 0.0
  %96 = vmatprep.subr.mxu0 0.0
  %97 = vmatpush1.msra.mxu0 0.0
  %98 = vmatprep.subr.mxu0 0.0
  %99 = vmatpush1.msra.mxu0 0.0
  %100 = vmatprep.subr.mxu0 0.0
  %101 = vmatpush1.msra.mxu0 0.0
  %102 = vmatprep.subr.mxu0 0.0
  %103 = vmatpush1.msra.mxu0 0.0
  %104 = vmatprep.subr.mxu0 0.0
  %105 = vmatpush1.msra.mxu0 0.0
  %106 = vmatprep.subr.mxu0 0.0
  %107 = vmatpush1.msra.mxu0 0.0
  %108 = vmatprep.subr.mxu0 0.0
  %109 = vmatpush1.msra.mxu0 0.0
  %110 = vmatprep.subr.mxu0 0.0
  %111 = vmatpush1.msra.mxu0 0.0
  %112 = vmatprep.subr.mxu0 0.0
  %113 = vmatpush1.msra.mxu0 0.0
  %114 = vmatprep.subr.mxu0 0.0
  %115 = vmatpush1.msra.mxu0 0.0
  %116 = vmatprep.subr.mxu0 0.0
  %117 = vmatpush1.msra.mxu0 0.0
  %118 = vmatprep.subr.mxu0 0.0
  %119 = vmatpush1.msra.mxu0 0.0
  %120 = vmatprep.subr.mxu0 0.0
  %121 = vmatpush1.msra.mxu0 0.0
  %122 = vmatprep.subr.mxu0 0.0
  %123 = vmatpush1.msra.mxu0 0.0
  %124 = vmatprep.subr.mxu0 0.0
  %125 = vmatpush1.msra.mxu0 0.0
  %126 = vmatprep.subr.mxu0 0.0
  %127 = vmatpush1.msra.mxu0 0.0
  %128 = vmatprep.subr.mxu0 0.0
  %129 = vmatpush1.msra.mxu0 0.0
  %130 = vmatprep.subr.mxu0 0.0
  %131 = vmatpush1.msra.mxu0 0.0
  %132 = vmatprep.subr.mxu0 0.0
  %133 = vmatpush1.msra.mxu0 0.0
  %134 = vmatprep.subr.mxu0 0.0
  %135 = vmatpush1.msra.mxu0 0.0
  %136 = vmatprep.subr.mxu0 0.0
  %137 = vmatpush1.msra.mxu0 0.0
  %138 = vmatprep.subr.mxu0 0.0
  %139 = vmatpush1.msra.mxu0 0.0
  %140 = vmatprep.subr.mxu0 0.0
  %141 = vmatpush1.msra.mxu0 0.0
  %142 = vmatprep.mubr.f32.mxu0 0.0
  %143 = vmatmul.mubr.f32.gmra.mrb[0].mxu0 %v55
  %v144 = vpop.f32.mrb[0].mxu0
  %v145 = vadd.f32 %v51, %v144
  %v146 = vpop.f32.mrb[0].mxu0
  %147 = vmatprep.mubr.f32.mxu0 0.0
  %148 = vmatmul.mubr.f32.gmra.mrb[0].mxu0 %v58
  %v149 = vpop.f32.mrb[0].mxu0
  %v150 = vadd.f32 %v51, %v149
  %v151 = vpop.f32.mrb[0].mxu0
  %152 = vmatprep.mubr.f32.mxu0 0.0
  %153 = vmatmul.mubr.f32.gmra.mrb[0].mxu0 %v61
  %v154 = vpop.f32.mrb[0].mxu0
  %v155 = vadd.f32 %v51, %v154
  %v156 = vpop.f32.mrb[0].mxu0
  %157 = vmatprep.mubr.f32.mxu0 0.0
  %158 = vmatmul.mubr.f32.gmra.mrb[0].mxu0 %v64
  %v159 = vpop.f32.mrb[0].mxu0
  %v160 = vadd.f32 %v51, %v159
  %v161 = vpop.f32.mrb[0].mxu0
  %162 = vmatprep.mubr.f32.mxu0 0.0
  %163 = vmatmul.mubr.f32.gmra.mrb[0].mxu0 %v67
  %v164 = vpop.f32.mrb[0].mxu0
  %v165 = vadd.f32 %v51, %v164
  %v166 = vpop.f32.mrb[0].mxu0
  %167 = vmatprep.mubr.f32.mxu0 0.0
  %168 = vmatmul.mubr.f32.gmra.mrb[0].mxu0 %v70
  %v169 = vpop.f32.mrb[0].mxu0
  %v170 = vadd.f32 %v51, %v169
  %v171 = vpop.f32.mrb[0].mxu0
  %172 = vmatprep.mubr.f32.mxu0 0.0
  %173 = vmatmul.mubr.f32.gmra.mrb[0].mxu0 %v73
  %v174 = vpop.f32.mrb[0].mxu0
  %v175 = vadd.f32 %v51, %v174
  %v176 = vpop.f32.mrb[0].mxu0
  %177 = vmatprep.mubr.f32.mxu0 0.0
  %178 = vmatmul.mubr.f32.gmra.mrb[0].mxu0 %v76
  %v179 = vpop.f32.mrb[0].mxu0
  %v180 = vadd.f32 %v51, %v179
  %v181 = vpop.f32.mrb[0].mxu0
  %182 = vdwg.mxu0
  %v183 = vmax.f32 %v145, 0.0
  %v184 = vmax.f32 %v150, 0.0
  %v185 = vmax.f32 %v155, 0.0
  %v186 = vmax.f32 %v160, 0.0
  %v187 = vmax.f32 %v165, 0.0
  %v188 = vmax.f32 %v170, 0.0
  %v189 = vmax.f32 %v175, 0.0
  %v190 = vmax.f32 %v180, 0.0
  %v191 = vld [vmem:[%s3] sm:$0xff]
  %v192 = vld [vmem:[%s3 + $0x8] sm:$0xff]
  %v193 = vld [vmem:[%s3 + $0x10] sm:$0xff]
  %v194 = vld [vmem:[%s3 + $0x18] sm:$0x7f]
  %v195 = vld [vmem:[%s4] sm:$0x1]
  %v197 = vlaneseq
  %v198 = vshrl.u32 %v197, 7
  %v199 = vsub.s32 0, %v198
  %v200 = vrot.slane %v195, %v199
  %vm202 = vcmask 252928
  %v204 = vsel %vm202, %v183, 0
  %v207 = vsel %vm202, %v184, 0
  %v210 = vsel %vm202, %v185, 0
  %v213 = vsel %vm202, %v186, 0
  %v216 = vsel %vm202, %v187, 0
  %v219 = vsel %vm202, %v188, 0
  %v222 = vsel %vm202, %v189, 0
  %v225 = vsel %vm202, %v190, 0
  %vm227 = vcmask 1046528
  %v229 = vsel %vm227, %v194, 0
  %231 = vmatprep.subr.mxu0 0.0
  %232 = vmatpush1.msra.mxu0 %v191
  %233 = vmatprep.subr.mxu0 0.0
  %234 = vmatpush1.msra.mxu0 %v192
  %235 = vmatprep.subr.mxu0 0.0
  %236 = vmatpush1.msra.mxu0 %v193
  %237 = vmatprep.subr.mxu0 0.0
  %238 = vmatpush1.msra.mxu0 %v229
  %239 = vmatprep.subr.mxu0 0.0
  %240 = vmatpush1.msra.mxu0 0.0
  %241 = vmatprep.subr.mxu0 0.0
  %242 = vmatpush1.msra.mxu0 0.0
  %243 = vmatprep.subr.mxu0 0.0
  %244 = vmatpush1.msra.mxu0 0.0
  %245 = vmatprep.subr.mxu0 0.0
  %246 = vmatpush1.msra.mxu0 0.0
  %247 = vmatprep.subr.mxu0 0.0
  %248 = vmatpush1.msra.mxu0 0.0
  %249 = vmatprep.subr.mxu0 0.0
  %250 = vmatpush1.msra.mxu0 0.0
  %251 = vmatprep.subr.mxu0 0.0
  %252 = vmatpush1.msra.mxu0 0.0
  %253 = vmatprep.subr.mxu0 0.0
  %254 = vmatpush1.msra.mxu0 0.0
  %255 = vmatprep.subr.mxu0 0.0
  %256 = vmatpush1.msra.mxu0 0.0
  %257 = vmatprep.subr.mxu0 0.0
  %258 = vmatpush1.msra.mxu0 0.0
  %259 = vmatprep.subr.mxu0 0.0
  %260 = vmatpush1.msra.mxu0 0.0
  %261 = vmatprep.subr.mxu0 0.0
  %262 = vmatpush1.msra.mxu0 0.0
  %263 = vmatprep.subr.mxu0 0.0
  %264 = vmatpush1.msra.mxu0 0.0
  %265 = vmatprep.subr.mxu0 0.0
  %266 = vmatpush1.msra.mxu0 0.0
  %267 = vmatprep.subr.mxu0 0.0
  %268 = vmatpush1.msra.mxu0 0.0
  %269 = vmatprep.subr.mxu0 0.0
  %270 = vmatpush1.msra.mxu0 0.0
  %271 = vmatprep.subr.mxu0 0.0
  %272 = vmatpush1.msra.mxu0 0.0
  %273 = vmatprep.subr.mxu0 0.0
  %274 = vmatpush1.msra.mxu0 0.0
  %275 = vmatprep.subr.mxu0 0.0
  %276 = vmatpush1.msra.mxu0 0.0
  %277 = vmatprep.subr.mxu0 0.0
  %278 = vmatpush1.msra.mxu0 0.0
  %279 = vmatprep.subr.mxu0 0.0
  %280 = vmatpush1.msra.mxu0 0.0
  %281 = vmatprep.subr.mxu0 0.0
  %282 = vmatpush1.msra.mxu0 0.0
  %283 = vmatprep.subr.mxu0 0.0
  %284 = vmatpush1.msra.mxu0 0.0
  %285 = vmatprep.subr.mxu0 0.0
  %286 = vmatpush1.msra.mxu0 0.0
  %287 = vmatprep.subr.mxu0 0.0
  %288 = vmatpush1.msra.mxu0 0.0
  %289 = vmatprep.subr.mxu0 0.0
  %290 = vmatpush1.msra.mxu0 0.0
  %291 = vmatprep.subr.mxu0 0.0
  %292 = vmatpush1.msra.mxu0 0.0
  %293 = vmatprep.subr.mxu0 0.0
  %294 = vmatpush1.msra.mxu0 0.0
  %295 = vmatprep.mubr.f32.mxu0 0.0
  %296 = vmatmul.mubr.f32.gmra.mrb[0].mxu0 %v204
  %v297 = vpop.f32.mrb[0].mxu0
  %v298 = vadd.f32 %v200, %v297
  %v299 = vpop.f32.mrb[0].mxu0
  %300 = vmatprep.mubr.f32.mxu0 0.0
  %301 = vmatmul.mubr.f32.gmra.mrb[0].mxu0 %v207
  %v302 = vpop.f32.mrb[0].mxu0
  %v303 = vadd.f32 %v200, %v302
  %v304 = vpop.f32.mrb[0].mxu0
  %305 = vmatprep.mubr.f32.mxu0 0.0
  %306 = vmatmul.mubr.f32.gmra.mrb[0].mxu0 %v210
  %v307 = vpop.f32.mrb[0].mxu0
  %v308 = vadd.f32 %v200, %v307
  %v309 = vpop.f32.mrb[0].mxu0
  %310 = vmatprep.mubr.f32.mxu0 0.0
  %311 = vmatmul.mubr.f32.gmra.mrb[0].mxu0 %v213
  %v312 = vpop.f32.mrb[0].mxu0
  %v313 = vadd.f32 %v200, %v312
  %v314 = vpop.f32.mrb[0].mxu0
  %315 = vmatprep.mubr.f32.mxu0 0.0
  %316 = vmatmul.mubr.f32.gmra.mrb[0].mxu0 %v216
  %v317 = vpop.f32.mrb[0].mxu0
  %v318 = vadd.f32 %v200, %v317
  %v319 = vpop.f32.mrb[0].mxu0
  %320 = vmatprep.mubr.f32.mxu0 0.0
  %321 = vmatmul.mubr.f32.gmra.mrb[0].mxu0 %v219
  %v322 = vpop.f32.mrb[0].mxu0
  %v323 = vadd.f32 %v200, %v322
  %v324 = vpop.f32.mrb[0].mxu0
  %325 = vmatprep.mubr.f32.mxu0 0.0
  %326 = vmatmul.mubr.f32.gmra.mrb[0].mxu0 %v222
  %v327 = vpop.f32.mrb[0].mxu0
  %v328 = vadd.f32 %v200, %v327
  %v329 = vpop.f32.mrb[0].mxu0
  %330 = vmatprep.mubr.f32.mxu0 0.0
  %331 = vmatmul.mubr.f32.gmra.mrb[0].mxu0 %v225
  %v332 = vpop.f32.mrb[0].mxu0
  %v333 = vadd.f32 %v200, %v332
  %v334 = vpop.f32.mrb[0].mxu0
  %335 = vdwg.mxu0
  %v336 = vmax.f32 %v298, 0.0
  %v337 = vmax.f32 %v303, 0.0
  %v338 = vmax.f32 %v308, 0.0
  %v339 = vmax.f32 %v313, 0.0
  %v340 = vmax.f32 %v318, 0.0
  %v341 = vmax.f32 %v323, 0.0
  %v342 = vmax.f32 %v328, 0.0
  %v343 = vmax.f32 %v333, 0.0
  %v344 = vld [vmem:[%s5] sm:$0xff]
  %v345 = vld [vmem:[%s5 + $0x8] sm:$0x7]
  %v346 = vld [vmem:[%s6] sm:$0x1]
  %v348 = vlaneseq
  %v349 = vshrl.u32 %v348, 7
  %v350 = vsub.s32 0, %v349
  %v351 = vrot.slane %v346, %v350
  %vm353 = vcmask 89088
  %v355 = vsel %vm353, %v336, 0
  %v358 = vsel %vm353, %v337, 0
  %v361 = vsel %vm353, %v338, 0
  %v364 = vsel %vm353, %v339, 0
  %v367 = vsel %vm353, %v340, 0
  %v370 = vsel %vm353, %v341, 0
  %v373 = vsel %vm353, %v342, 0
  %v376 = vsel %vm353, %v343, 0
  %vm378 = vcmask 1042432
  %v380 = vsel %vm378, %v345, 0
  %382 = vmatprep.subr.mxu0 0.0
  %383 = vmatpush1.msra.mxu0 %v344
  %384 = vmatprep.subr.mxu0 0.0
  %385 = vmatpush1.msra.mxu0 %v380
  %386 = vmatprep.subr.mxu0 0.0
  %387 = vmatpush1.msra.mxu0 0.0
  %388 = vmatprep.subr.mxu0 0.0
  %389 = vmatpush1.msra.mxu0 0.0
  %390 = vmatprep.subr.mxu0 0.0
  %391 = vmatpush1.msra.mxu0 0.0
  %392 = vmatprep.subr.mxu0 0.0
  %393 = vmatpush1.msra.mxu0 0.0
  %394 = vmatprep.subr.mxu0 0.0
  %395 = vmatpush1.msra.mxu0 0.0
  %396 = vmatprep.subr.mxu0 0.0
  %397 = vmatpush1.msra.mxu0 0.0
  %398 = vmatprep.subr.mxu0 0.0
  %399 = vmatpush1.msra.mxu0 0.0
  %400 = vmatprep.subr.mxu0 0.0
  %401 = vmatpush1.msra.mxu0 0.0
  %402 = vmatprep.subr.mxu0 0.0
  %403 = vmatpush1.msra.mxu0 0.0
  %404 = vmatprep.subr.mxu0 0.0
  %405 = vmatpush1.msra.mxu0 0.0
  %406 = vmatprep.subr.mxu0 0.0
  %407 = vmatpush1.msra.mxu0 0.0
  %408 = vmatprep.subr.mxu0 0.0
  %409 = vmatpush1.msra.mxu0 0.0
  %410 = vmatprep.subr.mxu0 0.0
  %411 = vmatpush1.msra.mxu0 0.0
  %412 = vmatprep.subr.mxu0 0.0
  %413 = vmatpush1.msra.mxu0 0.0
  %414 = vmatprep.subr.mxu0 0.0
  %415 = vmatpush1.msra.mxu0 0.0
  %416 = vmatprep.subr.mxu0 0.0
  %417 = vmatpush1.msra.mxu0 0.0
  %418 = vmatprep.subr.mxu0 0.0
  %419 = vmatpush1.msra.mxu0 0.0
  %420 = vmatprep.subr.mxu0 0.0
  %421 = vmatpush1.msra.mxu0 0.0
  %422 = vmatprep.subr.mxu0 0.0
  %423 = vmatpush1.msra.mxu0 0.0
  %424 = vmatprep.subr.mxu0 0.0
  %425 = vmatpush1.msra.mxu0 0.0
  %426 = vmatprep.subr.mxu0 0.0
  %427 = vmatpush1.msra.mxu0 0.0
  %428 = vmatprep.subr.mxu0 0.0
  %429 = vmatpush1.msra.mxu0 0.0
  %430 = vmatprep.subr.mxu0 0.0
  %431 = vmatpush1.msra.mxu0 0.0
  %432 = vmatprep.subr.mxu0 0.0
  %433 = vmatpush1.msra.mxu0 0.0
  %434 = vmatprep.subr.mxu0 0.0
  %435 = vmatpush1.msra.mxu0 0.0
  %436 = vmatprep.subr.mxu0 0.0
  %437 = vmatpush1.msra.mxu0 0.0
  %438 = vmatprep.subr.mxu0 0.0
  %439 = vmatpush1.msra.mxu0 0.0
  %440 = vmatprep.subr.mxu0 0.0
  %441 = vmatpush1.msra.mxu0 0.0
  %442 = vmatprep.subr.mxu0 0.0
  %443 = vmatpush1.msra.mxu0 0.0
  %444 = vmatprep.subr.mxu0 0.0
  %445 = vmatpush1.msra.mxu0 0.0
  %446 = vmatprep.mubr.f32.mxu0 0.0
  %447 = vmatmul.mubr.f32.gmra.mrb[0].mxu0 %v355
  %v448 = vpop.f32.mrb[0].mxu0
  %v449 = vadd.f32 %v351, %v448
  %v450 = vpop.f32.mrb[0].mxu0
  %451 = vmatprep.mubr.f32.mxu0 0.0
  %452 = vmatmul.mubr.f32.gmra.mrb[0].mxu0 %v358
  %v453 = vpop.f32.mrb[0].mxu0
  %v454 = vadd.f32 %v351, %v453
  %v455 = vpop.f32.mrb[0].mxu0
  %456 = vmatprep.mubr.f32.mxu0 0.0
  %457 = vmatmul.mubr.f32.gmra.mrb[0].mxu0 %v361
  %v458 = vpop.f32.mrb[0].mxu0
  %v459 = vadd.f32 %v351, %v458
  %v460 = vpop.f32.mrb[0].mxu0
  %461 = vmatprep.mubr.f32.mxu0 0.0
  %462 = vmatmul.mubr.f32.gmra.mrb[0].mxu0 %v364
  %v463 = vpop.f32.mrb[0].mxu0
  %v464 = vadd.f32 %v351, %v463
  %v465 = vpop.f32.mrb[0].mxu0
  %466 = vmatprep.mubr.f32.mxu0 0.0
  %467 = vmatmul.mubr.f32.gmra.mrb[0].mxu0 %v367
  %v468 = vpop.f32.mrb[0].mxu0
  %v469 = vadd.f32 %v351, %v468
  %v470 = vpop.f32.mrb[0].mxu0
  %471 = vmatprep.mubr.f32.mxu0 0.0
  %472 = vmatmul.mubr.f32.gmra.mrb[0].mxu0 %v370
  %v473 = vpop.f32.mrb[0].mxu0
  %v474 = vadd.f32 %v351, %v473
  %v475 = vpop.f32.mrb[0].mxu0
  %476 = vmatprep.mubr.f32.mxu0 0.0
  %477 = vmatmul.mubr.f32.gmra.mrb[0].mxu0 %v373
  %v478 = vpop.f32.mrb[0].mxu0
  %v479 = vadd.f32 %v351, %v478
  %v480 = vpop.f32.mrb[0].mxu0
  %481 = vmatprep.mubr.f32.mxu0 0.0
  %482 = vmatmul.mubr.f32.gmra.mrb[0].mxu0 %v376
  %v483 = vpop.f32.mrb[0].mxu0
  %v484 = vadd.f32 %v351, %v483
  %v485 = vpop.f32.mrb[0].mxu0
  %486 = vdwg.mxu0
  %v487 = vmax.f32 %v449, 0.0
  %v488 = vmax.f32 %v454, 0.0
  %v489 = vmax.f32 %v459, 0.0
  %v490 = vmax.f32 %v464, 0.0
  %v491 = vmax.f32 %v469, 0.0
  %v492 = vmax.f32 %v474, 0.0
  %v493 = vmax.f32 %v479, 0.0
  %v494 = vmax.f32 %v484, 0.0
  %v495 = vld [vmem:[%s7] sm:$0x1]
  %v496 = vld [vmem:[#allocation2] sm:$0x1]
  %498 = vset.pattern.permute.xlu0 0
  %499 = vperm.xlu0 %498, %v496
  %v500 = vpop.permute.xlu0 %499
  %v502 = vlaneseq
  %v503 = vshrl.u32 %v502, 7
  %v504 = vsub.s32 0, %v503
  %v505 = vrot.slane %v500, %v504
  %vm506 = vcmask 23552
  %v508 = vsel %vm506, %v495, 0
  %v511 = vsel %vm506, %v487, 0
  %v514 = vsel %vm506, %v488, 0
  %v517 = vsel %vm506, %v489, 0
  %v520 = vsel %vm506, %v490, 0
  %v523 = vsel %vm506, %v491, 0
  %v526 = vsel %vm506, %v492, 0
  %v529 = vsel %vm506, %v493, 0
  %v532 = vsel %vm506, %v494, 0
  %534 = vmatprep.subr.mxu0 0.0
  %535 = vmatpush1.xpose.msra.mxu0 %v511
  %536 = vmatprep.subr.mxu0 0.0
  %537 = vmatpush1.xpose.msra.mxu0 %v514
  %538 = vmatprep.subr.mxu0 0.0
  %539 = vmatpush1.xpose.msra.mxu0 %v517
  %540 = vmatprep.subr.mxu0 0.0
  %541 = vmatpush1.xpose.msra.mxu0 %v520
  %542 = vmatprep.subr.mxu0 0.0
  %543 = vmatpush1.xpose.msra.mxu0 %v523
  %544 = vmatprep.subr.mxu0 0.0
  %545 = vmatpush1.xpose.msra.mxu0 %v526
  %546 = vmatprep.subr.mxu0 0.0
  %547 = vmatpush1.xpose.msra.mxu0 %v529
  %548 = vmatprep.subr.mxu0 0.0
  %549 = vmatpush1.xpose.msra.mxu0 %v532
  %550 = vmatprep.subr.mxu0 0.0
  %551 = vmatpush1.xpose.msra.mxu0 0.0
  %552 = vmatprep.subr.mxu0 0.0
  %553 = vmatpush1.xpose.msra.mxu0 0.0
  %554 = vmatprep.subr.mxu0 0.0
  %555 = vmatpush1.xpose.msra.mxu0 0.0
  %556 = vmatprep.subr.mxu0 0.0
  %557 = vmatpush1.xpose.msra.mxu0 0.0
  %558 = vmatprep.subr.mxu0 0.0
  %559 = vmatpush1.xpose.msra.mxu0 0.0
  %560 = vmatprep.subr.mxu0 0.0
  %561 = vmatpush1.xpose.msra.mxu0 0.0
  %562 = vmatprep.subr.mxu0 0.0
  %563 = vmatpush1.xpose.msra.mxu0 0.0
  %564 = vmatprep.subr.mxu0 0.0
  %565 = vmatpush1.xpose.msra.mxu0 0.0
  %566 = vmatprep.subr.mxu0 0.0
  %567 = vmatpush1.xpose.msra.mxu0 0.0
  %568 = vmatprep.subr.mxu0 0.0
  %569 = vmatpush1.xpose.msra.mxu0 0.0
  %570 = vmatprep.subr.mxu0 0.0
  %571 = vmatpush1.xpose.msra.mxu0 0.0
  %572 = vmatprep.subr.mxu0 0.0
  %573 = vmatpush1.xpose.msra.mxu0 0.0
  %574 = vmatprep.subr.mxu0 0.0
  %575 = vmatpush1.xpose.msra.mxu0 0.0
  %576 = vmatprep.subr.mxu0 0.0
  %577 = vmatpush1.xpose.msra.mxu0 0.0
  %578 = vmatprep.subr.mxu0 0.0
  %579 = vmatpush1.xpose.msra.mxu0 0.0
  %580 = vmatprep.subr.mxu0 0.0
  %581 = vmatpush1.xpose.msra.mxu0 0.0
  %582 = vmatprep.subr.mxu0 0.0
  %583 = vmatpush1.xpose.msra.mxu0 0.0
  %584 = vmatprep.subr.mxu0 0.0
  %585 = vmatpush1.xpose.msra.mxu0 0.0
  %586 = vmatprep.subr.mxu0 0.0
  %587 = vmatpush1.xpose.msra.mxu0 0.0
  %588 = vmatprep.subr.mxu0 0.0
  %589 = vmatpush1.xpose.msra.mxu0 0.0
  %590 = vmatprep.subr.mxu0 0.0
  %591 = vmatpush1.xpose.msra.mxu0 0.0
  %592 = vmatprep.subr.mxu0 0.0
  %593 = vmatpush1.xpose.msra.mxu0 0.0
  %594 = vmatprep.subr.mxu0 0.0
  %595 = vmatpush1.xpose.msra.mxu0 0.0
  %596 = vmatprep.subr.mxu0 0.0
  %597 = vmatpush1.xpose.msra.mxu0 0.0
  %598 = vmatprep.mubr.f32.mxu0 0.0
  %599 = vmatmul.mubr.f32.gmra.mrb[0].mxu0 %v508
  %v600 = vpop.f32.mrb[0].mxu0
  %v601 = vadd.f32 %v505, %v600
  %v602 = vpop.f32.mrb[0].mxu0
  %603 = vdwg.mxu0
  %vm604 = vcmask 516096
  %605 = vst.msk [vmem:[%s9] sm:$0x1] %vm604, %v601
  // Predicated region
  $region38: #{basenet_forward.7} parent=0 // pred_check
    _
  $region39: #{basenet_forward.7} parent=0 // pred_check_branch
    %607 = sbr.rel (0) target = $region41
  $region40: #{basenet_forward.7} parent=0 // pred_region
    _
  $region41: #{basenet_forward.7} parent=0 // pred_fallthru
    _
  // Predicated region
  $region42: #{basenet_forward.7} parent=0 // pred_check
    _
  $region43: #{basenet_forward.7} parent=0 // pred_check_branch
    %609 = sbr.rel (0) target = $region45
  $region44: #{basenet_forward.7} parent=0 // pred_region
    _
  $region45: #{basenet_forward.7} parent=0 // pred_fallthru
    _

</llo_original>
